<compile_context>
chip_gen: v7x
topology: tpu7x:2x2x1
jax: 0.10.0
libtpu: 0.0.40
codegen_flags: <defaults>
</compile_context>

<pallas_src>
import functools
import math

import jax
import jax.numpy as jnp
from jax.experimental import pallas as pl
from jax.experimental.pallas import tpu as pltpu


def _layer_norm(x, gamma, beta, eps=1e-5):
    # PyTorch nn.LayerNorm: biased variance, eps inside rsqrt.
    mu = jnp.mean(x, axis=-1, keepdims=True)
    var = jnp.mean((x - mu) ** 2, axis=-1, keepdims=True)
    return (x - mu) * jax.lax.rsqrt(var + eps) * gamma + beta


def encoder_layer_kernel(
    src_ref,            # (Bt, S, H)        f32
    wqkv_ref,           # (H, 3H)           bf16  (Q cols pre-scaled by 1/sqrt(hd))
    wo_ref,             # (H, H)            bf16
    w1_ref,             # (H, PF)           bf16
    w2_ref,             # (PF, H)           bf16
    vecs_ref,           # (10, max(H,PF))   f32   rows: bq,bk,bv,bo,g1,be1,b2,g2,be2,b1
    out_ref,            # (Bt, S, H)        f32
    *, n_heads, head_dim, pf_dim,
):
    Bt, S, H = src_ref.shape

    x = src_ref[...]                              # (Bt, S, H) f32
    x2 = x.reshape(Bt * S, H)                     # leading-dim merge (free)
    xb = x2.astype(jnp.bfloat16)

    # ---- fused QKV projection: one MXU call, N = 3H ----
    qkv = jnp.dot(xb, wqkv_ref[...], preferred_element_type=jnp.float32)  # (M, 3H)

    vecs = vecs_ref[...]                          # (10, W) f32, static row slices
    bq, bk, bv = vecs[0, :H], vecs[1, :H], vecs[2, :H]
    bo, g1, be1 = vecs[3, :H], vecs[4, :H], vecs[5, :H]
    b2, g2, be2 = vecs[6, :H], vecs[7, :H], vecs[8, :H]
    b1 = vecs[9, :pf_dim]

    # 1/sqrt(head_dim) already folded into the Q weight columns and bq.
    q = (qkv[:, :H] + bq).reshape(Bt, S, H).astype(jnp.bfloat16)
    k = (qkv[:, H:2 * H] + bk).reshape(Bt, S, H).astype(jnp.bfloat16)
    v = (qkv[:, 2 * H:] + bv).reshape(Bt, S, H).astype(jnp.bfloat16)

    # ---- multi-head self-attention (mask=None). Static unrolled head loop,
    #      all Bt batch rows batched in one dot_general per head; per-head
    #      outputs stay in registers and are concatenated along the lane axis
    #      (no VMEM scratch, no masked partial stores). ----
    head_outs = []
    for h in range(n_heads):
        sl = slice(h * head_dim, (h + 1) * head_dim)
        qh, kh, vh = q[:, :, sl], k[:, :, sl], v[:, :, sl]          # (Bt, S, hd)
        e = jnp.einsum('bqd,bkd->bqk', qh, kh,
                       preferred_element_type=jnp.float32)           # (Bt, S, S)
        e = e - jnp.max(e, axis=-1, keepdims=True)
        p = jnp.exp(e)
        inv_den = pl.reciprocal(jnp.sum(p, axis=-1, keepdims=True), approx=True)
        attn = (p * inv_den).astype(jnp.bfloat16)
        head_outs.append(jnp.einsum('bqk,bkd->bqd', attn, vh,
                                    preferred_element_type=jnp.float32))

    attn_cat = jnp.concatenate(head_outs, axis=-1)                    # (Bt, S, H) f32
    attn_cat = attn_cat.reshape(Bt * S, H).astype(jnp.bfloat16)

    attn_out = jnp.dot(attn_cat, wo_ref[...],
                       preferred_element_type=jnp.float32) + bo

    # ---- residual + LayerNorm 1 (dropout == identity) ----
    r = _layer_norm(x2 + attn_out, g1, be1)

    # ---- position-wise feed-forward ----
    h1 = jnp.maximum(
        jnp.dot(r.astype(jnp.bfloat16), w1_ref[...],
                preferred_element_type=jnp.float32) + b1, 0.0)
    h2 = jnp.dot(h1.astype(jnp.bfloat16), w2_ref[...],
                 preferred_element_type=jnp.float32) + b2

    # ---- residual + LayerNorm 2 ----
    out = _layer_norm(r + h2, g2, be2)
    out_ref[...] = out.reshape(Bt, S, H)          # lane-dense store (H = 128)


def _pick_block_b(B, S, row_cap=2048):
    """Largest divisor of B keeping flattened M = block_b*S <= row_cap.

    If the whole batch fits in a single grid step but splitting it in two still
    leaves >= 256 flattened rows per step, split so a v7x megacore can shard
    the grid across its two TensorCores.
    """
    best = 1
    for d in range(1, B + 1):
        if B % d == 0 and d * S <= row_cap:
            best = d
    if best == B and B % 2 == 0 and (B // 2) * S >= 256:
        best = B // 2
    return best


def encoder_layer(src, kparams, *, n_heads):
    B, S, H = src.shape
    assert H % n_heads == 0
    head_dim = H // n_heads
    assert n_heads * head_dim == H  # guards full coverage of the lane concat
    PF = kparams["w1"].shape[1]
    W = kparams["vecs"].shape[1]

    block_b = _pick_block_b(B, S)
    grid = (B // block_b,)

    const = lambda shape: pl.BlockSpec(shape, lambda b: (0, 0))

    kernel = functools.partial(encoder_layer_kernel,
                               n_heads=n_heads, head_dim=head_dim, pf_dim=PF)

    flops = int(2 * B * S * H * (4 * H + 2 * PF)      # QKV + out-proj + FF matmuls
                + 4 * B * S * S * H)                   # attention scores + attn@V
    bytes_accessed = int(
        2 * B * S * H * 4                              # src + out (f32)
        + 2 * (kparams["wqkv"].size + kparams["wo"].size
               + kparams["w1"].size + kparams["w2"].size)   # bf16 weights
        + 4 * kparams["vecs"].size)                         # packed f32 vectors
    cost = pl.CostEstimate(flops=flops,
                           transcendentals=int(B * n_heads * S * S + 2 * B * S),
                           bytes_accessed=bytes_accessed)

    return pl.pallas_call(
        kernel,
        out_shape=jax.ShapeDtypeStruct((B, S, H), jnp.float32),
        grid_spec=pltpu.PrefetchScalarGridSpec(
            num_scalar_prefetch=0,
            grid=grid,
            in_specs=[
                pl.BlockSpec((block_b, S, H), lambda b: (b, 0, 0)),   # src
                const((H, 3 * H)),                                    # Wqkv (bf16)
                const((H, H)),                                        # Wo   (bf16)
                const((H, PF)),                                       # W1   (bf16)
                const((PF, H)),                                       # W2   (bf16)
                const((10, W)),                                       # packed vectors
            ],
            out_specs=pl.BlockSpec((block_b, S, H), lambda b: (b, 0, 0)),
        ),
        compiler_params=pltpu.CompilerParams(
            dimension_semantics=("parallel",),
            # Above v5e (16 MiB) / v6e (32 MiB) default scoped limits, below
            # v7x's 64 MiB physical VMEM; 2048-row tiles use well under this.
            vmem_limit_bytes=48 * 1024 * 1024,
        ),
        cost_estimate=cost,
    )(
        src,
        kparams["wqkv"], kparams["wo"], kparams["w1"], kparams["w2"],
        kparams["vecs"],
    )


# ---------------------------------------------------------------------------
# Parameter construction (weights stored as (in, out) == PyTorch weight.T)
# ---------------------------------------------------------------------------
def init_params(key, hid_dim, pf_dim):
    ks = jax.random.split(key, 12)
    n = lambda k, shp: (0.02 * jax.random.normal(k, shp)).astype(jnp.float32)
    return {
        "wq": n(ks[0], (hid_dim, hid_dim)), "bq": n(ks[1], (hid_dim,)),
        "wk": n(ks[2], (hid_dim, hid_dim)), "bk": n(ks[3], (hid_dim,)),
        "wv": n(ks[4], (hid_dim, hid_dim)), "bv": n(ks[5], (hid_dim,)),
        "wo": n(ks[6], (hid_dim, hid_dim)), "bo": n(ks[7], (hid_dim,)),
        "w1": n(ks[8], (hid_dim, pf_dim)),  "b1": n(ks[9], (pf_dim,)),
        "w2": n(ks[10], (pf_dim, hid_dim)), "b2": n(ks[11], (hid_dim,)),
        "g1": jnp.ones((hid_dim,), jnp.float32),
        "be1": jnp.zeros((hid_dim,), jnp.float32),
        "g2": jnp.ones((hid_dim,), jnp.float32),
        "be2": jnp.zeros((hid_dim,), jnp.float32),
    }


def pack_params(p, n_heads):
    """Fuse QKV (scale folded into Q), cast MXU weights to bf16, pack vectors."""
    hid_dim = p["wq"].shape[0]
    pf_dim = p["w1"].shape[1]
    head_dim = hid_dim // n_heads
    inv_scale = jnp.float32(1.0 / math.sqrt(head_dim))   # 1/8 for hd=64 (exact)

    wqkv = jnp.concatenate([p["wq"] * inv_scale, p["wk"], p["wv"]], axis=1)
    W = max(hid_dim, pf_dim)
    pad = lambda v: jnp.pad(v, (0, W - v.shape[0]))
    vecs = jnp.stack([
        pad(p["bq"] * inv_scale), pad(p["bk"]), pad(p["bv"]),
        pad(p["bo"]), pad(p["g1"]), pad(p["be1"]),
        pad(p["b2"]), pad(p["g2"]), pad(p["be2"]),
        pad(p["b1"]),
    ])
    return {
        "wqkv": wqkv.astype(jnp.bfloat16),
        "wo": p["wo"].astype(jnp.bfloat16),
        "w1": p["w1"].astype(jnp.bfloat16),
        "w2": p["w2"].astype(jnp.bfloat16),
        "vecs": vecs.astype(jnp.float32),
    }


# ---------------------------------------------------------------------------
# Pure-JAX reference using the same (bf16-rounded, scale-folded) packed params
# ---------------------------------------------------------------------------
def encoder_layer_ref(src, kp, *, n_heads):
    B, S, H = src.shape
    hd = H // n_heads
    PF = kp["w1"].shape[1]
    f32 = lambda w: w.astype(jnp.float32)
    vecs = kp["vecs"]
    bq, bk, bv = vecs[0, :H], vecs[1, :H], vecs[2, :H]
    bo, g1, be1 = vecs[3, :H], vecs[4, :H], vecs[5, :H]
    b2, g2, be2 = vecs[6, :H], vecs[7, :H], vecs[8, :H]
    b1 = vecs[9, :PF]

    qkv = src @ f32(kp["wqkv"])
    q = qkv[..., :H] + bq          # scale already folded in
    k = qkv[..., H:2 * H] + bk
    v = qkv[..., 2 * H:] + bv

    def split(t):
        return t.reshape(B, S, n_heads, hd).transpose(0, 2, 1, 3)

    qh, kh, vh = split(q), split(k), split(v)
    e = jnp.einsum('bhqd,bhkd->bhqk', qh, kh)          # no extra /sqrt(hd)
    a = jax.nn.softmax(e, axis=-1)
    o = jnp.einsum('bhqk,bhkd->bhqd', a, vh).transpose(0, 2, 1, 3).reshape(B, S, H)
    o = o @ f32(kp["wo"]) + bo

    r = _layer_norm(src + o, g1, be1)
    h1 = jax.nn.relu(r @ f32(kp["w1"]) + b1)
    h2 = h1 @ f32(kp["w2"]) + b2
    return _layer_norm(r + h2, g2, be2)


if __name__ == "__main__":
    # Shapes implied by CVRAE_forecasting.trans_enc:
    #   Encoder(act_dim, hid_dim=128, n_layers=1, n_heads=2, pf_dim=128, ...)
    B, S, H, NH, PF = 2, 8, 128, 2, 128

    key = jax.random.PRNGKey(0)
    k_src, k_par = jax.random.split(key)
    src = jax.random.normal(k_src, (B, S, H), dtype=jnp.float32)
    params = pack_params(init_params(k_par, H, PF), n_heads=NH)

    out = encoder_layer(src, params, n_heads=NH)
    jax.block_until_ready(out)
    assert out.shape == (B, S, H)

    ref = encoder_layer_ref(src, params, n_heads=NH)
    err = float(jnp.max(jnp.abs(out - ref)))
    assert err < 3e-2, f"max abs error vs reference too large: {err}"

    print("KERNEL_OK")
</pallas_src>

<mosaic_0001>
module attributes {stable_mosaic.version = 11 : i64} {
  func.func @encoder_layer_kernel(%arg0: i32, %arg1: memref<2x8x128xf32, #tpu.memory_space<vmem>>, %arg2: memref<128x384xbf16, #tpu.memory_space<vmem>>, %arg3: memref<128x128xbf16, #tpu.memory_space<vmem>>, %arg4: memref<128x128xbf16, #tpu.memory_space<vmem>>, %arg5: memref<128x128xbf16, #tpu.memory_space<vmem>>, %arg6: memref<10x128xf32, #tpu.memory_space<vmem>>, %arg7: memref<2x8x128xf32, #tpu.memory_space<vmem>>) attributes {dimension_semantics = [#tpu.dimension_semantics<parallel>], iteration_bounds = array<i64: 1>, scalar_prefetch = 0 : i64, scratch_operands = 0 : i64, tpu.core_type = #tpu.core_type<tc>, window_params = [{transform_indices = @transform_0, window_bounds = array<i64: 2, 8, 128>}, {pipeline_mode = #tpu.pipeline_mode<synchronous>, transform_indices = @transform_1, window_bounds = array<i64: 128, 384>}, {pipeline_mode = #tpu.pipeline_mode<synchronous>, transform_indices = @transform_2, window_bounds = array<i64: 128, 128>}, {pipeline_mode = #tpu.pipeline_mode<synchronous>, transform_indices = @transform_3, window_bounds = array<i64: 128, 128>}, {pipeline_mode = #tpu.pipeline_mode<synchronous>, transform_indices = @transform_4, window_bounds = array<i64: 128, 128>}, {pipeline_mode = #tpu.pipeline_mode<synchronous>, transform_indices = @transform_5, window_bounds = array<i64: 10, 128>}, {transform_indices = @transform_6, window_bounds = array<i64: 2, 8, 128>}]} {
    %c0 = arith.constant 0 : index
    %c0_0 = arith.constant 0 : index
    %c0_1 = arith.constant 0 : index
    %0 = vector.load %arg1[%c0, %c0_0, %c0_1] : memref<2x8x128xf32, #tpu.memory_space<vmem>>, vector<2x8x128xf32>
    %1 = vector.shape_cast %0 : vector<2x8x128xf32> to vector<16x128xf32>
    %2 = arith.truncf %1 : vector<16x128xf32> to vector<16x128xbf16>
    %c0_2 = arith.constant 0 : index
    %c0_3 = arith.constant 0 : index
    %3 = vector.load %arg2[%c0_2, %c0_3] : memref<128x384xbf16, #tpu.memory_space<vmem>>, vector<128x384xbf16>
    %cst = arith.constant dense<0.000000e+00> : vector<16x384xf32>
    %4 = tpu.matmul %2, %3, %cst {dimension_numbers = #tpu.dot_dimension_numbers<[1], [0], [0], [1], [0, 0, 1, 1], [], []>} : vector<16x128xbf16>, vector<128x384xbf16>, vector<16x384xf32> -> vector<16x384xf32>
    %c0_4 = arith.constant 0 : index
    %c0_5 = arith.constant 0 : index
    %5 = vector.load %arg6[%c0_4, %c0_5] : memref<10x128xf32, #tpu.memory_space<vmem>>, vector<10x128xf32>
    %6 = vector.extract_strided_slice %5 {offsets = [0, 0], sizes = [1, 128], strides = [1, 1]} : vector<10x128xf32> to vector<1x128xf32>
    %7 = vector.shape_cast %6 : vector<1x128xf32> to vector<128xf32>
    %8 = vector.extract_strided_slice %5 {offsets = [1, 0], sizes = [1, 128], strides = [1, 1]} : vector<10x128xf32> to vector<1x128xf32>
    %9 = vector.shape_cast %8 : vector<1x128xf32> to vector<128xf32>
    %10 = vector.extract_strided_slice %5 {offsets = [2, 0], sizes = [1, 128], strides = [1, 1]} : vector<10x128xf32> to vector<1x128xf32>
    %11 = vector.shape_cast %10 : vector<1x128xf32> to vector<128xf32>
    %12 = vector.extract_strided_slice %5 {offsets = [3, 0], sizes = [1, 128], strides = [1, 1]} : vector<10x128xf32> to vector<1x128xf32>
    %13 = vector.shape_cast %12 : vector<1x128xf32> to vector<128xf32>
    %14 = vector.extract_strided_slice %5 {offsets = [4, 0], sizes = [1, 128], strides = [1, 1]} : vector<10x128xf32> to vector<1x128xf32>
    %15 = vector.shape_cast %14 : vector<1x128xf32> to vector<128xf32>
    %16 = vector.extract_strided_slice %5 {offsets = [5, 0], sizes = [1, 128], strides = [1, 1]} : vector<10x128xf32> to vector<1x128xf32>
    %17 = vector.shape_cast %16 : vector<1x128xf32> to vector<128xf32>
    %18 = vector.extract_strided_slice %5 {offsets = [6, 0], sizes = [1, 128], strides = [1, 1]} : vector<10x128xf32> to vector<1x128xf32>
    %19 = vector.shape_cast %18 : vector<1x128xf32> to vector<128xf32>
    %20 = vector.extract_strided_slice %5 {offsets = [7, 0], sizes = [1, 128], strides = [1, 1]} : vector<10x128xf32> to vector<1x128xf32>
    %21 = vector.shape_cast %20 : vector<1x128xf32> to vector<128xf32>
    %22 = vector.extract_strided_slice %5 {offsets = [8, 0], sizes = [1, 128], strides = [1, 1]} : vector<10x128xf32> to vector<1x128xf32>
    %23 = vector.shape_cast %22 : vector<1x128xf32> to vector<128xf32>
    %24 = vector.extract_strided_slice %5 {offsets = [9, 0], sizes = [1, 128], strides = [1, 1]} : vector<10x128xf32> to vector<1x128xf32>
    %25 = vector.shape_cast %24 : vector<1x128xf32> to vector<128xf32>
    %26 = vector.extract_strided_slice %4 {offsets = [0, 0], sizes = [16, 128], strides = [1, 1]} : vector<16x384xf32> to vector<16x128xf32>
    %27 = vector.shape_cast %7 : vector<128xf32> to vector<1x128xf32>
    %28 = vector.broadcast %27 : vector<1x128xf32> to vector<16x128xf32>
    %29 = arith.addf %26, %28 : vector<16x128xf32>
    %30 = vector.shape_cast %29 : vector<16x128xf32> to vector<2x8x128xf32>
    %31 = arith.truncf %30 : vector<2x8x128xf32> to vector<2x8x128xbf16>
    %32 = vector.extract_strided_slice %4 {offsets = [0, 128], sizes = [16, 128], strides = [1, 1]} : vector<16x384xf32> to vector<16x128xf32>
    %33 = vector.shape_cast %9 : vector<128xf32> to vector<1x128xf32>
    %34 = vector.broadcast %33 : vector<1x128xf32> to vector<16x128xf32>
    %35 = arith.addf %32, %34 : vector<16x128xf32>
    %36 = vector.shape_cast %35 : vector<16x128xf32> to vector<2x8x128xf32>
    %37 = arith.truncf %36 : vector<2x8x128xf32> to vector<2x8x128xbf16>
    %38 = vector.extract_strided_slice %4 {offsets = [0, 256], sizes = [16, 128], strides = [1, 1]} : vector<16x384xf32> to vector<16x128xf32>
    %39 = vector.shape_cast %11 : vector<128xf32> to vector<1x128xf32>
    %40 = vector.broadcast %39 : vector<1x128xf32> to vector<16x128xf32>
    %41 = arith.addf %38, %40 : vector<16x128xf32>
    %42 = vector.shape_cast %41 : vector<16x128xf32> to vector<2x8x128xf32>
    %43 = arith.truncf %42 : vector<2x8x128xf32> to vector<2x8x128xbf16>
    %44 = vector.extract_strided_slice %31 {offsets = [0, 0, 0], sizes = [2, 8, 64], strides = [1, 1, 1]} : vector<2x8x128xbf16> to vector<2x8x64xbf16>
    %45 = vector.extract_strided_slice %37 {offsets = [0, 0, 0], sizes = [2, 8, 64], strides = [1, 1, 1]} : vector<2x8x128xbf16> to vector<2x8x64xbf16>
    %46 = vector.extract_strided_slice %43 {offsets = [0, 0, 0], sizes = [2, 8, 64], strides = [1, 1, 1]} : vector<2x8x128xbf16> to vector<2x8x64xbf16>
    "tpu.trace_start"() <{level = 10 : i32, message = "bqd,bkd->bqk"}> : () -> ()
    %cst_6 = arith.constant dense<0.000000e+00> : vector<2x8x8xf32>
    %47 = tpu.matmul %44, %45, %cst_6 {dimension_numbers = #tpu.dot_dimension_numbers<[2], [2], [1], [1], [0, 0, 0, 1, 1, 1], [0], [0]>} : vector<2x8x64xbf16>, vector<2x8x64xbf16>, vector<2x8x8xf32> -> vector<2x8x8xf32>
    "tpu.trace_stop"() : () -> ()
    %cst_7 = arith.constant dense<0xFF800000> : vector<2x8xf32>
    %48 = vector.multi_reduction <maximumf>, %47, %cst_7 [2] : vector<2x8x8xf32> to vector<2x8xf32>
    %49 = vector.shape_cast %48 : vector<2x8xf32> to vector<2x8x1xf32>
    %50 = vector.broadcast %49 : vector<2x8x1xf32> to vector<2x8x8xf32>
    %51 = arith.subf %47, %50 : vector<2x8x8xf32>
    %52 = math.exp %51 : vector<2x8x8xf32>
    %cst_8 = arith.constant dense<0.000000e+00> : vector<2x8xf32>
    %53 = vector.multi_reduction <add>, %52, %cst_8 [2] : vector<2x8x8xf32> to vector<2x8xf32>
    %54 = vector.shape_cast %53 : vector<2x8xf32> to vector<2x8x1xf32>
    %55 = tpu.reciprocal %54 {approx = true} : vector<2x8x1xf32> -> vector<2x8x1xf32>
    %56 = vector.broadcast %55 : vector<2x8x1xf32> to vector<2x8x8xf32>
    %57 = arith.mulf %52, %56 : vector<2x8x8xf32>
    %58 = arith.truncf %57 : vector<2x8x8xf32> to vector<2x8x8xbf16>
    "tpu.trace_start"() <{level = 10 : i32, message = "bqk,bkd->bqd"}> : () -> ()
    %cst_9 = arith.constant dense<0.000000e+00> : vector<2x8x64xf32>
    %59 = tpu.matmul %58, %46, %cst_9 {dimension_numbers = #tpu.dot_dimension_numbers<[2], [1], [1], [2], [0, 0, 0, 1, 1, 2], [0], [0]>} : vector<2x8x8xbf16>, vector<2x8x64xbf16>, vector<2x8x64xf32> -> vector<2x8x64xf32>
    "tpu.trace_stop"() : () -> ()
    %60 = vector.extract_strided_slice %31 {offsets = [0, 0, 64], sizes = [2, 8, 64], strides = [1, 1, 1]} : vector<2x8x128xbf16> to vector<2x8x64xbf16>
    %61 = vector.extract_strided_slice %37 {offsets = [0, 0, 64], sizes = [2, 8, 64], strides = [1, 1, 1]} : vector<2x8x128xbf16> to vector<2x8x64xbf16>
    %62 = vector.extract_strided_slice %43 {offsets = [0, 0, 64], sizes = [2, 8, 64], strides = [1, 1, 1]} : vector<2x8x128xbf16> to vector<2x8x64xbf16>
    "tpu.trace_start"() <{level = 10 : i32, message = "bqd,bkd->bqk"}> : () -> ()
    %cst_10 = arith.constant dense<0.000000e+00> : vector<2x8x8xf32>
    %63 = tpu.matmul %60, %61, %cst_10 {dimension_numbers = #tpu.dot_dimension_numbers<[2], [2], [1], [1], [0, 0, 0, 1, 1, 1], [0], [0]>} : vector<2x8x64xbf16>, vector<2x8x64xbf16>, vector<2x8x8xf32> -> vector<2x8x8xf32>
    "tpu.trace_stop"() : () -> ()
    %cst_11 = arith.constant dense<0xFF800000> : vector<2x8xf32>
    %64 = vector.multi_reduction <maximumf>, %63, %cst_11 [2] : vector<2x8x8xf32> to vector<2x8xf32>
    %65 = vector.shape_cast %64 : vector<2x8xf32> to vector<2x8x1xf32>
    %66 = vector.broadcast %65 : vector<2x8x1xf32> to vector<2x8x8xf32>
    %67 = arith.subf %63, %66 : vector<2x8x8xf32>
    %68 = math.exp %67 : vector<2x8x8xf32>
    %cst_12 = arith.constant dense<0.000000e+00> : vector<2x8xf32>
    %69 = vector.multi_reduction <add>, %68, %cst_12 [2] : vector<2x8x8xf32> to vector<2x8xf32>
    %70 = vector.shape_cast %69 : vector<2x8xf32> to vector<2x8x1xf32>
    %71 = tpu.reciprocal %70 {approx = true} : vector<2x8x1xf32> -> vector<2x8x1xf32>
    %72 = vector.broadcast %71 : vector<2x8x1xf32> to vector<2x8x8xf32>
    %73 = arith.mulf %68, %72 : vector<2x8x8xf32>
    %74 = arith.truncf %73 : vector<2x8x8xf32> to vector<2x8x8xbf16>
    "tpu.trace_start"() <{level = 10 : i32, message = "bqk,bkd->bqd"}> : () -> ()
    %cst_13 = arith.constant dense<0.000000e+00> : vector<2x8x64xf32>
    %75 = tpu.matmul %74, %62, %cst_13 {dimension_numbers = #tpu.dot_dimension_numbers<[2], [1], [1], [2], [0, 0, 0, 1, 1, 2], [0], [0]>} : vector<2x8x8xbf16>, vector<2x8x64xbf16>, vector<2x8x64xf32> -> vector<2x8x64xf32>
    "tpu.trace_stop"() : () -> ()
    %76 = tpu.concatenate %59, %75 in 2 : vector<2x8x64xf32>, vector<2x8x64xf32> -> vector<2x8x128xf32>
    %77 = vector.shape_cast %76 : vector<2x8x128xf32> to vector<16x128xf32>
    %78 = arith.truncf %77 : vector<16x128xf32> to vector<16x128xbf16>
    %c0_14 = arith.constant 0 : index
    %c0_15 = arith.constant 0 : index
    %79 = vector.load %arg3[%c0_14, %c0_15] : memref<128x128xbf16, #tpu.memory_space<vmem>>, vector<128x128xbf16>
    %cst_16 = arith.constant dense<0.000000e+00> : vector<16x128xf32>
    %80 = tpu.matmul %78, %79, %cst_16 {dimension_numbers = #tpu.dot_dimension_numbers<[1], [0], [0], [1], [0, 0, 1, 1], [], []>} : vector<16x128xbf16>, vector<128x128xbf16>, vector<16x128xf32> -> vector<16x128xf32>
    %81 = vector.shape_cast %13 : vector<128xf32> to vector<1x128xf32>
    %82 = vector.broadcast %81 : vector<1x128xf32> to vector<16x128xf32>
    %83 = arith.addf %80, %82 : vector<16x128xf32>
    %84 = arith.addf %1, %83 : vector<16x128xf32>
    %cst_17 = arith.constant dense<0.000000e+00> : vector<16xf32>
    %85 = vector.multi_reduction <add>, %84, %cst_17 [1] : vector<16x128xf32> to vector<16xf32>
    %86 = vector.shape_cast %85 : vector<16xf32> to vector<16x1xf32>
    %cst_18 = arith.constant 1.280000e+02 : f32
    %87 = vector.broadcast %cst_18 : f32 to vector<16x1xf32>
    %88 = arith.divf %86, %87 : vector<16x1xf32>
    %89 = vector.broadcast %88 : vector<16x1xf32> to vector<16x128xf32>
    %90 = arith.subf %84, %89 : vector<16x128xf32>
    %91 = arith.mulf %90, %90 : vector<16x128xf32>
    %cst_19 = arith.constant dense<0.000000e+00> : vector<16xf32>
    %92 = vector.multi_reduction <add>, %91, %cst_19 [1] : vector<16x128xf32> to vector<16xf32>
    %93 = vector.shape_cast %92 : vector<16xf32> to vector<16x1xf32>
    %cst_20 = arith.constant 1.280000e+02 : f32
    %94 = vector.broadcast %cst_20 : f32 to vector<16x1xf32>
    %95 = arith.divf %93, %94 : vector<16x1xf32>
    %96 = vector.broadcast %88 : vector<16x1xf32> to vector<16x128xf32>
    %97 = arith.subf %84, %96 : vector<16x128xf32>
    %cst_21 = arith.constant 9.99999974E-6 : f32
    %98 = vector.broadcast %cst_21 : f32 to vector<16x1xf32>
    %99 = arith.addf %95, %98 : vector<16x1xf32>
    %100 = math.rsqrt %99 : vector<16x1xf32>
    %101 = vector.broadcast %100 : vector<16x1xf32> to vector<16x128xf32>
    %102 = arith.mulf %97, %101 : vector<16x128xf32>
    %103 = vector.shape_cast %15 : vector<128xf32> to vector<1x128xf32>
    %104 = vector.broadcast %103 : vector<1x128xf32> to vector<16x128xf32>
    %105 = arith.mulf %102, %104 : vector<16x128xf32>
    %106 = vector.shape_cast %17 : vector<128xf32> to vector<1x128xf32>
    %107 = vector.broadcast %106 : vector<1x128xf32> to vector<16x128xf32>
    %108 = arith.addf %105, %107 : vector<16x128xf32>
    %109 = arith.truncf %108 : vector<16x128xf32> to vector<16x128xbf16>
    %c0_22 = arith.constant 0 : index
    %c0_23 = arith.constant 0 : index
    %110 = vector.load %arg4[%c0_22, %c0_23] : memref<128x128xbf16, #tpu.memory_space<vmem>>, vector<128x128xbf16>
    %cst_24 = arith.constant dense<0.000000e+00> : vector<16x128xf32>
    %111 = tpu.matmul %109, %110, %cst_24 {dimension_numbers = #tpu.dot_dimension_numbers<[1], [0], [0], [1], [0, 0, 1, 1], [], []>} : vector<16x128xbf16>, vector<128x128xbf16>, vector<16x128xf32> -> vector<16x128xf32>
    %112 = vector.shape_cast %25 : vector<128xf32> to vector<1x128xf32>
    %113 = vector.broadcast %112 : vector<1x128xf32> to vector<16x128xf32>
    %114 = arith.addf %111, %113 : vector<16x128xf32>
    %cst_25 = arith.constant 0.000000e+00 : f32
    %115 = vector.broadcast %cst_25 : f32 to vector<16x128xf32>
    %116 = arith.maximumf %114, %115 : vector<16x128xf32>
    %117 = arith.truncf %116 : vector<16x128xf32> to vector<16x128xbf16>
    %c0_26 = arith.constant 0 : index
    %c0_27 = arith.constant 0 : index
    %118 = vector.load %arg5[%c0_26, %c0_27] : memref<128x128xbf16, #tpu.memory_space<vmem>>, vector<128x128xbf16>
    %cst_28 = arith.constant dense<0.000000e+00> : vector<16x128xf32>
    %119 = tpu.matmul %117, %118, %cst_28 {dimension_numbers = #tpu.dot_dimension_numbers<[1], [0], [0], [1], [0, 0, 1, 1], [], []>} : vector<16x128xbf16>, vector<128x128xbf16>, vector<16x128xf32> -> vector<16x128xf32>
    %120 = vector.shape_cast %19 : vector<128xf32> to vector<1x128xf32>
    %121 = vector.broadcast %120 : vector<1x128xf32> to vector<16x128xf32>
    %122 = arith.addf %119, %121 : vector<16x128xf32>
    %123 = arith.addf %108, %122 : vector<16x128xf32>
    %cst_29 = arith.constant dense<0.000000e+00> : vector<16xf32>
    %124 = vector.multi_reduction <add>, %123, %cst_29 [1] : vector<16x128xf32> to vector<16xf32>
    %125 = vector.shape_cast %124 : vector<16xf32> to vector<16x1xf32>
    %cst_30 = arith.constant 1.280000e+02 : f32
    %126 = vector.broadcast %cst_30 : f32 to vector<16x1xf32>
    %127 = arith.divf %125, %126 : vector<16x1xf32>
    %128 = vector.broadcast %127 : vector<16x1xf32> to vector<16x128xf32>
    %129 = arith.subf %123, %128 : vector<16x128xf32>
    %130 = arith.mulf %129, %129 : vector<16x128xf32>
    %cst_31 = arith.constant dense<0.000000e+00> : vector<16xf32>
    %131 = vector.multi_reduction <add>, %130, %cst_31 [1] : vector<16x128xf32> to vector<16xf32>
    %132 = vector.shape_cast %131 : vector<16xf32> to vector<16x1xf32>
    %cst_32 = arith.constant 1.280000e+02 : f32
    %133 = vector.broadcast %cst_32 : f32 to vector<16x1xf32>
    %134 = arith.divf %132, %133 : vector<16x1xf32>
    %135 = vector.broadcast %127 : vector<16x1xf32> to vector<16x128xf32>
    %136 = arith.subf %123, %135 : vector<16x128xf32>
    %cst_33 = arith.constant 9.99999974E-6 : f32
    %137 = vector.broadcast %cst_33 : f32 to vector<16x1xf32>
    %138 = arith.addf %134, %137 : vector<16x1xf32>
    %139 = math.rsqrt %138 : vector<16x1xf32>
    %140 = vector.broadcast %139 : vector<16x1xf32> to vector<16x128xf32>
    %141 = arith.mulf %136, %140 : vector<16x128xf32>
    %142 = vector.shape_cast %21 : vector<128xf32> to vector<1x128xf32>
    %143 = vector.broadcast %142 : vector<1x128xf32> to vector<16x128xf32>
    %144 = arith.mulf %141, %143 : vector<16x128xf32>
    %145 = vector.shape_cast %23 : vector<128xf32> to vector<1x128xf32>
    %146 = vector.broadcast %145 : vector<1x128xf32> to vector<16x128xf32>
    %147 = arith.addf %144, %146 : vector<16x128xf32>
    %148 = vector.shape_cast %147 : vector<16x128xf32> to vector<2x8x128xf32>
    %c0_34 = arith.constant 0 : index
    %c0_35 = arith.constant 0 : index
    %c0_36 = arith.constant 0 : index
    %149 = vector.load %arg7[%c0_34, %c0_35, %c0_36] : memref<2x8x128xf32, #tpu.memory_space<vmem>>, vector<2x8x128xf32>
    tpu.vector_store %arg7[%c0_34, %c0_35, %c0_36], %148 {strides = array<i32>} : memref<2x8x128xf32, #tpu.memory_space<vmem>>, vector<2x8x128xf32>,
    return
  }
  func.func @transform_0(%arg0: i32) -> (i32, i32, i32) {
    %c0_i32 = arith.constant 0 : i32
    %c0_i32_0 = arith.constant 0 : i32
    %c0_i32_1 = arith.constant 0 : i32
    return %arg0, %c0_i32, %c0_i32_0 : i32, i32, i32
  }
  func.func @transform_1(%arg0: i32) -> (i32, i32) {
    %c0_i32 = arith.constant 0 : i32
    %c0_i32_0 = arith.constant 0 : i32
    %c0_i32_1 = arith.constant 0 : i32
    return %c0_i32, %c0_i32_0 : i32, i32
  }
  func.func @transform_2(%arg0: i32) -> (i32, i32) {
    %c0_i32 = arith.constant 0 : i32
    %c0_i32_0 = arith.constant 0 : i32
    %c0_i32_1 = arith.constant 0 : i32
    return %c0_i32, %c0_i32_0 : i32, i32
  }
  func.func @transform_3(%arg0: i32) -> (i32, i32) {
    %c0_i32 = arith.constant 0 : i32
    %c0_i32_0 = arith.constant 0 : i32
    %c0_i32_1 = arith.constant 0 : i32
    return %c0_i32, %c0_i32_0 : i32, i32
  }
  func.func @transform_4(%arg0: i32) -> (i32, i32) {
    %c0_i32 = arith.constant 0 : i32
    %c0_i32_0 = arith.constant 0 : i32
    %c0_i32_1 = arith.constant 0 : i32
    return %c0_i32, %c0_i32_0 : i32, i32
  }
  func.func @transform_5(%arg0: i32) -> (i32, i32) {
    %c0_i32 = arith.constant 0 : i32
    %c0_i32_0 = arith.constant 0 : i32
    %c0_i32_1 = arith.constant 0 : i32
    return %c0_i32, %c0_i32_0 : i32, i32
  }
  func.func @transform_6(%arg0: i32) -> (i32, i32, i32) {
    %c0_i32 = arith.constant 0 : i32
    %c0_i32_0 = arith.constant 0 : i32
    %c0_i32_1 = arith.constant 0 : i32
    return %arg0, %c0_i32, %c0_i32_0 : i32, i32, i32
  }
}

</mosaic_0001>

<llo_original>
// kernel: tpu_custom_call.1
$region0: #{tpu_custom_call.1}
  #allocation0 [shape = 'u32[]', space=smem, size = 0x4, offset = 0x4, fixed_abs, tag = 'smem constant byte address 0x4 - core index']
  #allocation1 [shape = 'u32[144,128]{1,0:T(1,128)}', space=vmem, size = 0x12000, scoped, tag = 'internal scratch']
  %s0 = inlined_call_operand.hbm [shape: f32[2,8,128], index: 0, kind: input, shape index: {}]
  %s1 = inlined_call_operand.hbm [shape: bf16[128,384], index: 1, kind: input, shape index: {}]
  %s2 = inlined_call_operand.hbm [shape: bf16[128,128], index: 2, kind: input, shape index: {}]
  %s3 = inlined_call_operand.hbm [shape: bf16[128,128], index: 3, kind: input, shape index: {}]
  %s4 = inlined_call_operand.hbm [shape: bf16[128,128], index: 4, kind: input, shape index: {}]
  %s5 = inlined_call_operand.vmem [shape: f32[10,128], index: 5, kind: input, shape index: {}]
  %s6 = inlined_call_operand.hbm [shape: f32[2,8,128], index: 6, kind: output, shape index: {}]
  %s7 = sld [smem:[#allocation0]]
  $region54: #{tpu_custom_call.1} parent=0
    _
  %s9 = ssub.s32 1, %s7
  %s10 = scalar_select 0, %s9, %s7
  $region1: #{tpu_custom_call.1} parent=0
    #allocation2 [shape = 'u8[8192]{0}', space=vmem, size = 0x2000, scoped, tag = 'input window, operand 0, single buffered']
    #allocation3 [shape = 's32[1]{0}', space=sflag, size = 0x4, scoped, tag = 'scoped memory for tpu_custom_call.1']
    #allocation4 [shape = 's32[1]{0}', space=sflag, size = 0x4, scoped, tag = 'scoped memory for tpu_custom_call.1']
    #allocation5 [shape = 'u8[98304]{0}', space=vmem, size = 0x18000, scoped, tag = 'input window, operand 1, single buffered']
    #allocation6 [shape = 's32[1]{0}', space=sflag, size = 0x4, scoped, tag = 'scoped memory for tpu_custom_call.1']
    #allocation7 [shape = 'u8[32768]{0}', space=vmem, size = 0x8000, scoped, tag = 'input window, operand 2, single buffered']
    #allocation8 [shape = 'u8[32768]{0}', space=vmem, size = 0x8000, scoped, tag = 'input window, operand 3, single buffered']
    #allocation9 [shape = 's32[1]{0}', space=sflag, size = 0x4, scoped, tag = 'scoped memory for tpu_custom_call.1']
    #allocation10 [shape = 'u8[32768]{0}', space=vmem, size = 0x8000, scoped, tag = 'input window, operand 4, single buffered']
    #allocation11 [shape = 'u8[8192]{0}', space=vmem, size = 0x2000, scoped, tag = 'output window, operand 0, single buffered']
    %11 = vsyncpa [#allocation3], 0
    %12 = vsyncpa [#allocation6], 0
    %13 = vsyncpa [#allocation9], 0
    %14 = vsyncpa [#allocation4], 0
    // Predicated region
    $region2: #{tpu_custom_call.1} parent=1 // pred_check
      _
    $region3: #{tpu_custom_call.1} parent=1 // pred_check_branch
      %16 = sbr.rel (0) target = $region5
    $region4: #{tpu_custom_call.1} parent=1 // pred_region
      %s18 = ssub.s32 256, 256
      %19 = vsyncadd [#allocation3], %s18
      %s20 = sshll.u32 [#allocation2], 4
      %s21 = int_to_ptr.vmem [resolvable:$true] %s20
      %26 = dma.hbm_to_vmem [thread:$0]  %s0, 256, %s21, [#allocation3], 128, 128, 8
    $region5: #{tpu_custom_call.1} parent=1 // pred_fallthru
      _
    // Predicated region
    $region6: #{tpu_custom_call.1} parent=1 // pred_check
      _
    $region7: #{tpu_custom_call.1} parent=1 // pred_check_branch
      %28 = sbr.rel (0) target = $region9
    $region8: #{tpu_custom_call.1} parent=1 // pred_region
      %s30 = ssub.s32 3072, 3072
      %31 = vsyncadd [#allocation6], %s30
      %s32 = sshll.u32 [#allocation5], 4
      %s33 = int_to_ptr.vmem [resolvable:$true] %s32
      %38 = dma.hbm_to_vmem [thread:$0]  %s1, 3072, %s33, [#allocation6], 192, 192, 12
    $region9: #{tpu_custom_call.1} parent=1 // pred_fallthru
      _
    // Predicated region
    $region10: #{tpu_custom_call.1} parent=1 // pred_check
      _
    $region11: #{tpu_custom_call.1} parent=1 // pred_check_branch
      %40 = sbr.rel (0) target = $region13
    $region12: #{tpu_custom_call.1} parent=1 // pred_region
      %s42 = ssub.s32 1024, 1024
      %43 = vsyncadd [#allocation6], %s42
      %s44 = sshll.u32 [#allocation7], 4
      %s45 = int_to_ptr.vmem [resolvable:$true] %s44
      %50 = dma.hbm_to_vmem [thread:$0]  %s2, 1024, %s45, [#allocation6], 64, 64, 4
    $region13: #{tpu_custom_call.1} parent=1 // pred_fallthru
      _
    // Predicated region
    $region14: #{tpu_custom_call.1} parent=1 // pred_check
      _
    $region15: #{tpu_custom_call.1} parent=1 // pred_check_branch
      %52 = sbr.rel (0) target = $region17
    $region16: #{tpu_custom_call.1} parent=1 // pred_region
      %s54 = ssub.s32 1024, 1024
      %55 = vsyncadd [#allocation9], %s54
      %s56 = sshll.u32 [#allocation8], 4
      %s57 = int_to_ptr.vmem [resolvable:$true] %s56
      %62 = dma.hbm_to_vmem [thread:$0]  %s3, 1024, %s57, [#allocation9], 64, 64, 4
    $region17: #{tpu_custom_call.1} parent=1 // pred_fallthru
      _
    // Predicated region
    $region18: #{tpu_custom_call.1} parent=1 // pred_check
      _
    $region19: #{tpu_custom_call.1} parent=1 // pred_check_branch
      %64 = sbr.rel (0) target = $region21
    $region20: #{tpu_custom_call.1} parent=1 // pred_region
      %s66 = ssub.s32 1024, 1024
      %67 = vsyncadd [#allocation9], %s66
      %s68 = sshll.u32 [#allocation10], 4
      %s69 = int_to_ptr.vmem [resolvable:$true] %s68
      %74 = dma.hbm_to_vmem [thread:$0]  %s4, 1024, %s69, [#allocation9], 64, 64, 4
    $region21: #{tpu_custom_call.1} parent=1 // pred_fallthru
      _
    // Predicated region
    $region22: #{tpu_custom_call.1} parent=1 // pred_check
      _
    $region23: #{tpu_custom_call.1} parent=1 // pred_check_branch
      %76 = sbr.rel (0) target = $region25
    $region24: #{tpu_custom_call.1} parent=1 // pred_region
      _
    $region25: #{tpu_custom_call.1} parent=1 // pred_fallthru
      _
    // Predicated region
    $region26: #{tpu_custom_call.1} parent=1 // pred_check
      _
    $region27: #{tpu_custom_call.1} parent=1 // pred_check_branch
      %78 = sbr.rel (0) target = $region29
    $region28: #{tpu_custom_call.1} parent=1 // pred_region
      %79 = dma.done [#allocation3], 256
    $region29: #{tpu_custom_call.1} parent=1 // pred_fallthru
      _
    // Predicated region
    $region30: #{tpu_custom_call.1} parent=1 // pred_check
      _
    $region31: #{tpu_custom_call.1} parent=1 // pred_check_branch
      %81 = sbr.rel (0) target = $region33
    $region32: #{tpu_custom_call.1} parent=1 // pred_region
      %82 = dma.done [#allocation6], 3072
    $region33: #{tpu_custom_call.1} parent=1 // pred_fallthru
      _
    // Predicated region
    $region34: #{tpu_custom_call.1} parent=1 // pred_check
      _
    $region35: #{tpu_custom_call.1} parent=1 // pred_check_branch
      %84 = sbr.rel (0) target = $region37
    $region36: #{tpu_custom_call.1} parent=1 // pred_region
      %85 = dma.done [#allocation6], 1024
    $region37: #{tpu_custom_call.1} parent=1 // pred_fallthru
      _
    // Predicated region
    $region38: #{tpu_custom_call.1} parent=1 // pred_check
      _
    $region39: #{tpu_custom_call.1} parent=1 // pred_check_branch
      %87 = sbr.rel (0) target = $region41
    $region40: #{tpu_custom_call.1} parent=1 // pred_region
      %88 = dma.done [#allocation9], 1024
    $region41: #{tpu_custom_call.1} parent=1 // pred_fallthru
      _
    // Predicated region
    $region42: #{tpu_custom_call.1} parent=1 // pred_check
      _
    $region43: #{tpu_custom_call.1} parent=1 // pred_check_branch
      %90 = sbr.rel (0) target = $region45
    $region44: #{tpu_custom_call.1} parent=1 // pred_region
      %91 = dma.done [#allocation9], 1024
    $region45: #{tpu_custom_call.1} parent=1 // pred_fallthru
      _
    %v93 = vld [vmem:[#allocation2] sm:$0xff]
    %v94 = vld [vmem:[#allocation2 + $0x8] sm:$0xff]
    %v95 = vpack.c.bf16 %v94, %v93
    %v96 = vld [vmem:[#allocation5] sm:$0xff]
    %v97 = vld [vmem:[#allocation5 + $0x8] sm:$0xf]
    %v98 = vld [vmem:[#allocation5 + $0xc] sm:$0xff]
    %v99 = vld [vmem:[#allocation5 + $0x14] sm:$0xf]
    %v100 = vld [vmem:[#allocation5 + $0x18] sm:$0xff]
    %v101 = vld [vmem:[#allocation5 + $0x20] sm:$0xf]
    %v102 = vld [vmem:[#allocation5 + $0x24] sm:$0xff]
    %v103 = vld [vmem:[#allocation5 + $0x2c] sm:$0xf]
    %v104 = vld [vmem:[#allocation5 + $0x30] sm:$0xff]
    %v105 = vld [vmem:[#allocation5 + $0x38] sm:$0xf]
    %v106 = vld [vmem:[#allocation5 + $0x3c] sm:$0xff]
    %v107 = vld [vmem:[#allocation5 + $0x44] sm:$0xf]
    %v108 = vld [vmem:[#allocation5 + $0x48] sm:$0xff]
    %v109 = vld [vmem:[#allocation5 + $0x50] sm:$0xf]
    %v110 = vld [vmem:[#allocation5 + $0x54] sm:$0xff]
    %v111 = vld [vmem:[#allocation5 + $0x5c] sm:$0xf]
    %v112 = vld [vmem:[#allocation5 + $0x60] sm:$0xff]
    %v113 = vld [vmem:[#allocation5 + $0x68] sm:$0xf]
    %v114 = vld [vmem:[#allocation5 + $0x6c] sm:$0xff]
    %v115 = vld [vmem:[#allocation5 + $0x74] sm:$0xf]
    %v116 = vld [vmem:[#allocation5 + $0x78] sm:$0xff]
    %v117 = vld [vmem:[#allocation5 + $0x80] sm:$0xf]
    %v118 = vld [vmem:[#allocation5 + $0x84] sm:$0xff]
    %v119 = vld [vmem:[#allocation5 + $0x8c] sm:$0xf]
    %v120 = vld [vmem:[#allocation5 + $0x90] sm:$0xff]
    %v121 = vld [vmem:[#allocation5 + $0x98] sm:$0xf]
    %v122 = vld [vmem:[#allocation5 + $0x9c] sm:$0xff]
    %v123 = vld [vmem:[#allocation5 + $0xa4] sm:$0xf]
    %v124 = vld [vmem:[#allocation5 + $0xa8] sm:$0xff]
    %v125 = vld [vmem:[#allocation5 + $0xb0] sm:$0xf]
    %v126 = vld [vmem:[#allocation5 + $0xb4] sm:$0xff]
    %v127 = vld [vmem:[#allocation5 + $0xbc] sm:$0xf]
    %v160 = vunpack.c.l.b16 %v96
    %v161 = vunpack.c.h.b16 %v96
    %v162 = vunpack.c.l.b16 %v97
    %v163 = vunpack.c.l.b16 %v98
    %v164 = vunpack.c.h.b16 %v98
    %v165 = vunpack.c.l.b16 %v99
    %v166 = vunpack.c.l.b16 %v100
    %v167 = vunpack.c.h.b16 %v100
    %v168 = vunpack.c.l.b16 %v101
    %v169 = vunpack.c.l.b16 %v102
    %v170 = vunpack.c.h.b16 %v102
    %v171 = vunpack.c.l.b16 %v103
    %v172 = vunpack.c.l.b16 %v104
    %v173 = vunpack.c.h.b16 %v104
    %v174 = vunpack.c.l.b16 %v105
    %v175 = vunpack.c.l.b16 %v106
    %v176 = vunpack.c.h.b16 %v106
    %v177 = vunpack.c.l.b16 %v107
    %v178 = vunpack.c.l.b16 %v108
    %v179 = vunpack.c.h.b16 %v108
    %v180 = vunpack.c.l.b16 %v109
    %v181 = vunpack.c.l.b16 %v110
    %v182 = vunpack.c.h.b16 %v110
    %v183 = vunpack.c.l.b16 %v111
    %v184 = vunpack.c.l.b16 %v112
    %v185 = vunpack.c.h.b16 %v112
    %v186 = vunpack.c.l.b16 %v113
    %v187 = vunpack.c.l.b16 %v114
    %v188 = vunpack.c.h.b16 %v114
    %v189 = vunpack.c.l.b16 %v115
    %v190 = vunpack.c.l.b16 %v116
    %v191 = vunpack.c.h.b16 %v116
    %v192 = vunpack.c.l.b16 %v117
    %v193 = vunpack.c.l.b16 %v118
    %v194 = vunpack.c.h.b16 %v118
    %v195 = vunpack.c.l.b16 %v119
    %v196 = vunpack.c.l.b16 %v120
    %v197 = vunpack.c.h.b16 %v120
    %v198 = vunpack.c.l.b16 %v121
    %v199 = vunpack.c.l.b16 %v122
    %v200 = vunpack.c.h.b16 %v122
    %v201 = vunpack.c.l.b16 %v123
    %v202 = vunpack.c.l.b16 %v124
    %v203 = vunpack.c.h.b16 %v124
    %v204 = vunpack.c.l.b16 %v125
    %v205 = vunpack.c.l.b16 %v126
    %v206 = vunpack.c.h.b16 %v126
    %v207 = vunpack.c.l.b16 %v127
    %v208 = vpack.c.b16 %v163, %v160
    %v209 = vpack.c.b16 %v164, %v161
    %v210 = vpack.c.b16 %v165, %v162
    %v211 = vpack.c.b16 %v169, %v166
    %v212 = vpack.c.b16 %v170, %v167
    %v213 = vpack.c.b16 %v171, %v168
    %v214 = vpack.c.b16 %v175, %v172
    %v215 = vpack.c.b16 %v176, %v173
    %v216 = vpack.c.b16 %v177, %v174
    %v217 = vpack.c.b16 %v181, %v178
    %v218 = vpack.c.b16 %v182, %v179
    %v219 = vpack.c.b16 %v183, %v180
    %v220 = vpack.c.b16 %v187, %v184
    %v221 = vpack.c.b16 %v188, %v185
    %v222 = vpack.c.b16 %v189, %v186
    %v223 = vpack.c.b16 %v193, %v190
    %v224 = vpack.c.b16 %v194, %v191
    %v225 = vpack.c.b16 %v195, %v192
    %v226 = vpack.c.b16 %v199, %v196
    %v227 = vpack.c.b16 %v200, %v197
    %v228 = vpack.c.b16 %v201, %v198
    %v229 = vpack.c.b16 %v205, %v202
    %v230 = vpack.c.b16 %v206, %v203
    %v231 = vpack.c.b16 %v207, %v204
    %256 = vmatprep.subr.bf16.mxu0 %v209
    %257 = vmatpush1.bf16.msra.mxu0 %v208
    %258 = vmatprep.subr.bf16.mxu0 %v212
    %259 = vmatpush1.bf16.msra.mxu0 %v211
    %260 = vmatprep.subr.bf16.mxu0 %v215
    %261 = vmatpush1.bf16.msra.mxu0 %v214
    %262 = vmatprep.subr.bf16.mxu0 %v218
    %263 = vmatpush1.bf16.msra.mxu0 %v217
    %264 = vmatprep.subr.bf16.mxu0 %v221
    %265 = vmatpush1.bf16.msra.mxu0 %v220
    %266 = vmatprep.subr.bf16.mxu0 %v224
    %267 = vmatpush1.bf16.msra.mxu0 %v223
    %268 = vmatprep.subr.bf16.mxu0 %v227
    %269 = vmatpush1.bf16.msra.mxu0 %v226
    %270 = vmatprep.subr.bf16.mxu0 %v230
    %271 = vmatpush1.bf16.msra.mxu0 %v229
    %272 = vmatprep.subr.bf16.mxu0 0
    %273 = vmatpush1.bf16.msra.mxu0 0
    %274 = vmatprep.subr.bf16.mxu0 0
    %275 = vmatpush1.bf16.msra.mxu0 0
    %276 = vmatprep.subr.bf16.mxu0 0
    %277 = vmatpush1.bf16.msra.mxu0 0
    %278 = vmatprep.subr.bf16.mxu0 0
    %279 = vmatpush1.bf16.msra.mxu0 0
    %280 = vmatprep.subr.bf16.mxu0 0
    %281 = vmatpush1.bf16.msra.mxu0 0
    %282 = vmatprep.subr.bf16.mxu0 0
    %283 = vmatpush1.bf16.msra.mxu0 0
    %284 = vmatprep.subr.bf16.mxu0 0
    %285 = vmatpush1.bf16.msra.mxu0 0
    %286 = vmatprep.subr.bf16.mxu0 0
    %287 = vmatpush1.bf16.msra.mxu0 0
    %288 = vmatprep.mubr.bf16.mxu0 0
    %289 = vmatmul.mubr.bf16.gmra.mrb[0].mxu0 %v95
    %v290 = vpop.f32.mrb[0].mxu0
    %v291 = vadd.f32 0.0, %v290
    %v292 = vpop.f32.mrb[0].mxu0
    %v293 = vadd.f32 0.0, %v292
    %v294 = vpop.f32.mrb[0].mxu0
    %v295 = vadd.f32 0.0, %v294
    %v296 = vpop.f32.mrb[0].mxu0
    %v297 = vadd.f32 0.0, %v296
    %298 = vdwg.mxu0
    %299 = vmatprep.subr.bf16.mxu0 0
    %300 = vmatpush1.bf16.msra.mxu0 %v210
    %301 = vmatprep.subr.bf16.mxu0 0
    %302 = vmatpush1.bf16.msra.mxu0 %v213
    %303 = vmatprep.subr.bf16.mxu0 0
    %304 = vmatpush1.bf16.msra.mxu0 %v216
    %305 = vmatprep.subr.bf16.mxu0 0
    %306 = vmatpush1.bf16.msra.mxu0 %v219
    %307 = vmatprep.subr.bf16.mxu0 0
    %308 = vmatpush1.bf16.msra.mxu0 %v222
    %309 = vmatprep.subr.bf16.mxu0 0
    %310 = vmatpush1.bf16.msra.mxu0 %v225
    %311 = vmatprep.subr.bf16.mxu0 0
    %312 = vmatpush1.bf16.msra.mxu0 %v228
    %313 = vmatprep.subr.bf16.mxu0 0
    %314 = vmatpush1.bf16.msra.mxu0 %v231
    %315 = vmatprep.subr.bf16.mxu0 0
    %316 = vmatpush1.bf16.msra.mxu0 0
    %317 = vmatprep.subr.bf16.mxu0 0
    %318 = vmatpush1.bf16.msra.mxu0 0
    %319 = vmatprep.subr.bf16.mxu0 0
    %320 = vmatpush1.bf16.msra.mxu0 0
    %321 = vmatprep.subr.bf16.mxu0 0
    %322 = vmatpush1.bf16.msra.mxu0 0
    %323 = vmatprep.subr.bf16.mxu0 0
    %324 = vmatpush1.bf16.msra.mxu0 0
    %325 = vmatprep.subr.bf16.mxu0 0
    %326 = vmatpush1.bf16.msra.mxu0 0
    %327 = vmatprep.subr.bf16.mxu0 0
    %328 = vmatpush1.bf16.msra.mxu0 0
    %329 = vmatprep.subr.bf16.mxu0 0
    %330 = vmatpush1.bf16.msra.mxu0 0
    %331 = vmatprep.mubr.bf16.mxu0 0
    %332 = vmatmul.mubr.bf16.gmra.mrb[0].mxu0 %v95
    %v333 = vpop.f32.mrb[0].mxu0
    %v334 = vadd.f32 0.0, %v333
    %v335 = vpop.f32.mrb[0].mxu0
    %v336 = vpop.f32.mrb[0].mxu0
    %v337 = vadd.f32 0.0, %v336
    %v338 = vpop.f32.mrb[0].mxu0
    %339 = vdwg.mxu0
    %v340 = vld [vmem:[%s5] sm:$0xff]
    %v341 = vld [vmem:[%s5 + $0x8] sm:$0x3]
    %v342 = vlaneseq
    %v343 = vshrl.u32 %v342, 7
    %v344 = vsub.s32 0, %v343
    %v345 = vrot.slane %v340, %v344
    %v346 = vadd.f32 %v291, %v345
    %v347 = vadd.f32 %v295, %v345
    %v348 = vpack.c.bf16 %v346, %v346
    %v349 = vpack.c.bf16 %v347, %v347
    %v350 = vlaneseq
    %v351 = vshrl.u32 %v350, 7
    %v352 = vsub.s32 1, %v351
    %v353 = vrot.slane %v340, %v352
    %v354 = vadd.f32 %v293, %v353
    %v355 = vadd.f32 %v297, %v353
    %v356 = vpack.c.bf16 %v354, %v354
    %v357 = vpack.c.bf16 %v355, %v355
    %v358 = vlaneseq
    %v359 = vshrl.u32 %v358, 7
    %v360 = vsub.s32 2, %v359
    %v361 = vrot.slane %v340, %v360
    %v362 = vadd.f32 %v334, %v361
    %v363 = vadd.f32 %v337, %v361
    %v364 = vpack.c.bf16 %v362, %v362
    %v365 = vpack.c.bf16 %v363, %v363
    %vm366 = vcmask 523264
    %v368 = vsel %vm366, %v348, 0
    %v371 = vsel %vm366, %v356, 0
    %373 = vmatprep.subr.bf16.mxu0 0
    %374 = vmatpush1.bf16.xpose.msra.mxu0 %v371
    %375 = vmatprep.subr.bf16.mxu0 0
    %376 = vmatpush1.bf16.xpose.msra.mxu0 0
    %377 = vmatprep.subr.bf16.mxu0 0
    %378 = vmatpush1.bf16.xpose.msra.mxu0 0
    %379 = vmatprep.subr.bf16.mxu0 0
    %380 = vmatpush1.bf16.xpose.msra.mxu0 0
    %381 = vmatprep.subr.bf16.mxu0 0
    %382 = vmatpush1.bf16.xpose.msra.mxu0 0
    %383 = vmatprep.subr.bf16.mxu0 0
    %384 = vmatpush1.bf16.xpose.msra.mxu0 0
    %385 = vmatprep.subr.bf16.mxu0 0
    %386 = vmatpush1.bf16.xpose.msra.mxu0 0
    %387 = vmatprep.subr.bf16.mxu0 0
    %388 = vmatpush1.bf16.xpose.msra.mxu0 0
    %389 = vmatprep.subr.bf16.mxu0 0
    %390 = vmatpush1.bf16.xpose.msra.mxu0 0
    %391 = vmatprep.subr.bf16.mxu0 0
    %392 = vmatpush1.bf16.xpose.msra.mxu0 0
    %393 = vmatprep.subr.bf16.mxu0 0
    %394 = vmatpush1.bf16.xpose.msra.mxu0 0
    %395 = vmatprep.subr.bf16.mxu0 0
    %396 = vmatpush1.bf16.xpose.msra.mxu0 0
    %397 = vmatprep.subr.bf16.mxu0 0
    %398 = vmatpush1.bf16.xpose.msra.mxu0 0
    %399 = vmatprep.subr.bf16.mxu0 0
    %400 = vmatpush1.bf16.xpose.msra.mxu0 0
    %401 = vmatprep.subr.bf16.mxu0 0
    %402 = vmatpush1.bf16.xpose.msra.mxu0 0
    %403 = vmatprep.subr.bf16.mxu0 0
    %404 = vmatpush1.bf16.xpose.msra.mxu0 0
    %405 = vmatprep.mubr.bf16.mxu0 0
    %406 = vmatmul.mubr.bf16.gmra.mrb[0].mxu0 %v368
    %v407 = vpop.f32.mrb[0].mxu0
    %v408 = vadd.f32 0.0, %v407
    %v409 = vpop.f32.mrb[0].mxu0
    %v410 = vpop.f32.mrb[0].mxu0
    %v411 = vpop.f32.mrb[0].mxu0
    %412 = vdwg.mxu0
    %v414 = vsel %vm366, %v349, 0
    %v417 = vsel %vm366, %v357, 0
    %419 = vmatprep.subr.bf16.mxu0 0
    %420 = vmatpush1.bf16.xpose.msra.mxu0 %v417
    %421 = vmatprep.subr.bf16.mxu0 0
    %422 = vmatpush1.bf16.xpose.msra.mxu0 0
    %423 = vmatprep.subr.bf16.mxu0 0
    %424 = vmatpush1.bf16.xpose.msra.mxu0 0
    %425 = vmatprep.subr.bf16.mxu0 0
    %426 = vmatpush1.bf16.xpose.msra.mxu0 0
    %427 = vmatprep.subr.bf16.mxu0 0
    %428 = vmatpush1.bf16.xpose.msra.mxu0 0
    %429 = vmatprep.subr.bf16.mxu0 0
    %430 = vmatpush1.bf16.xpose.msra.mxu0 0
    %431 = vmatprep.subr.bf16.mxu0 0
    %432 = vmatpush1.bf16.xpose.msra.mxu0 0
    %433 = vmatprep.subr.bf16.mxu0 0
    %434 = vmatpush1.bf16.xpose.msra.mxu0 0
    %435 = vmatprep.subr.bf16.mxu0 0
    %436 = vmatpush1.bf16.xpose.msra.mxu0 0
    %437 = vmatprep.subr.bf16.mxu0 0
    %438 = vmatpush1.bf16.xpose.msra.mxu0 0
    %439 = vmatprep.subr.bf16.mxu0 0
    %440 = vmatpush1.bf16.xpose.msra.mxu0 0
    %441 = vmatprep.subr.bf16.mxu0 0
    %442 = vmatpush1.bf16.xpose.msra.mxu0 0
    %443 = vmatprep.subr.bf16.mxu0 0
    %444 = vmatpush1.bf16.xpose.msra.mxu0 0
    %445 = vmatprep.subr.bf16.mxu0 0
    %446 = vmatpush1.bf16.xpose.msra.mxu0 0
    %447 = vmatprep.subr.bf16.mxu0 0
    %448 = vmatpush1.bf16.xpose.msra.mxu0 0
    %449 = vmatprep.subr.bf16.mxu0 0
    %450 = vmatpush1.bf16.xpose.msra.mxu0 0
    %451 = vmatprep.mubr.bf16.mxu0 0
    %452 = vmatmul.mubr.bf16.gmra.mrb[0].mxu0 %v414
    %v453 = vpop.f32.mrb[0].mxu0
    %v454 = vadd.f32 0.0, %v453
    %v455 = vpop.f32.mrb[0].mxu0
    %v456 = vpop.f32.mrb[0].mxu0
    %v457 = vpop.f32.mrb[0].mxu0
    %458 = vdwg.mxu0
    %vm459 = vcmask 64512
    %v460 = vsel %vm459, %v408, -inf
    %461 = vmax.xlane.f32.xlu0 %v460
    %v462 = vpop.xlane.xlu0 %461
    %v463 = vsel %vm459, %v454, -inf
    %464 = vmax.xlane.f32.xlu0 %v463
    %v465 = vpop.xlane.xlu0 %464
    %v466 = vsub.f32 %v408, %v462
    %v467 = vsub.f32 %v454, %v465
    %v468 = vmul.f32 %v466, 1.442695
    %v469 = vpow.pop %v468
    %v470 = vmul.f32 %v467, 1.442695
    %v471 = vpow.pop %v470
    %v472 = vsel %vm459, %v469, 0.0
    %473 = vadd.xlane.f32.xlu0 %v472
    %v474 = vpop.xlane.xlu0 %473
    %v475 = vsel %vm459, %v471, 0.0
    %476 = vadd.xlane.f32.xlu0 %v475
    %v477 = vpop.xlane.xlu0 %476
    %v478 = vrcp.pop %v474
    %v479 = vrcp.pop %v477
    %v480 = vmul.f32 %v469, %v478
    %v481 = vmul.f32 %v471, %v479
    %v482 = vpack.c.bf16 %v480, %v480
    %v483 = vpack.c.bf16 %v481, %v481
    %v485 = vsel %vm459, %v482, 0
    %vm487 = vcmask 1043456
    %v489 = vsel %vm487, %v364, 0
    %491 = vmatprep.subr.bf16.mxu0 0
    %492 = vmatpush1.bf16.msra.mxu0 %v489
    %493 = vmatprep.subr.bf16.mxu0 0
    %494 = vmatpush1.bf16.msra.mxu0 0
    %495 = vmatprep.subr.bf16.mxu0 0
    %496 = vmatpush1.bf16.msra.mxu0 0
    %497 = vmatprep.subr.bf16.mxu0 0
    %498 = vmatpush1.bf16.msra.mxu0 0
    %499 = vmatprep.subr.bf16.mxu0 0
    %500 = vmatpush1.bf16.msra.mxu0 0
    %501 = vmatprep.subr.bf16.mxu0 0
    %502 = vmatpush1.bf16.msra.mxu0 0
    %503 = vmatprep.subr.bf16.mxu0 0
    %504 = vmatpush1.bf16.msra.mxu0 0
    %505 = vmatprep.subr.bf16.mxu0 0
    %506 = vmatpush1.bf16.msra.mxu0 0
    %507 = vmatprep.subr.bf16.mxu0 0
    %508 = vmatpush1.bf16.msra.mxu0 0
    %509 = vmatprep.subr.bf16.mxu0 0
    %510 = vmatpush1.bf16.msra.mxu0 0
    %511 = vmatprep.subr.bf16.mxu0 0
    %512 = vmatpush1.bf16.msra.mxu0 0
    %513 = vmatprep.subr.bf16.mxu0 0
    %514 = vmatpush1.bf16.msra.mxu0 0
    %515 = vmatprep.subr.bf16.mxu0 0
    %516 = vmatpush1.bf16.msra.mxu0 0
    %517 = vmatprep.subr.bf16.mxu0 0
    %518 = vmatpush1.bf16.msra.mxu0 0
    %519 = vmatprep.subr.bf16.mxu0 0
    %520 = vmatpush1.bf16.msra.mxu0 0
    %521 = vmatprep.subr.bf16.mxu0 0
    %522 = vmatpush1.bf16.msra.mxu0 0
    %523 = vmatprep.mubr.bf16.mxu0 0
    %524 = vmatmul.mubr.bf16.gmra.mrb[0].mxu0 %v485
    %v525 = vpop.f32.mrb[0].mxu0
    %v526 = vadd.f32 0.0, %v525
    %v527 = vpop.f32.mrb[0].mxu0
    %v528 = vpop.f32.mrb[0].mxu0
    %v529 = vpop.f32.mrb[0].mxu0
    %530 = vdwg.mxu0
    %v532 = vsel %vm459, %v483, 0
    %v535 = vsel %vm487, %v365, 0
    %537 = vmatprep.subr.bf16.mxu0 0
    %538 = vmatpush1.bf16.msra.mxu0 %v535
    %539 = vmatprep.subr.bf16.mxu0 0
    %540 = vmatpush1.bf16.msra.mxu0 0
    %541 = vmatprep.subr.bf16.mxu0 0
    %542 = vmatpush1.bf16.msra.mxu0 0
    %543 = vmatprep.subr.bf16.mxu0 0
    %544 = vmatpush1.bf16.msra.mxu0 0
    %545 = vmatprep.subr.bf16.mxu0 0
    %546 = vmatpush1.bf16.msra.mxu0 0
    %547 = vmatprep.subr.bf16.mxu0 0
    %548 = vmatpush1.bf16.msra.mxu0 0
    %549 = vmatprep.subr.bf16.mxu0 0
    %550 = vmatpush1.bf16.msra.mxu0 0
    %551 = vmatprep.subr.bf16.mxu0 0
    %552 = vmatpush1.bf16.msra.mxu0 0
    %553 = vmatprep.subr.bf16.mxu0 0
    %554 = vmatpush1.bf16.msra.mxu0 0
    %555 = vmatprep.subr.bf16.mxu0 0
    %556 = vmatpush1.bf16.msra.mxu0 0
    %557 = vmatprep.subr.bf16.mxu0 0
    %558 = vmatpush1.bf16.msra.mxu0 0
    %559 = vmatprep.subr.bf16.mxu0 0
    %560 = vmatpush1.bf16.msra.mxu0 0
    %561 = vmatprep.subr.bf16.mxu0 0
    %562 = vmatpush1.bf16.msra.mxu0 0
    %563 = vmatprep.subr.bf16.mxu0 0
    %564 = vmatpush1.bf16.msra.mxu0 0
    %565 = vmatprep.subr.bf16.mxu0 0
    %566 = vmatpush1.bf16.msra.mxu0 0
    %567 = vmatprep.subr.bf16.mxu0 0
    %568 = vmatpush1.bf16.msra.mxu0 0
    %569 = vmatprep.mubr.bf16.mxu0 0
    %570 = vmatmul.mubr.bf16.gmra.mrb[0].mxu0 %v532
    %v571 = vpop.f32.mrb[0].mxu0
    %v572 = vadd.f32 0.0, %v571
    %v573 = vpop.f32.mrb[0].mxu0
    %v574 = vpop.f32.mrb[0].mxu0
    %v575 = vpop.f32.mrb[0].mxu0
    %576 = vdwg.mxu0
    %578 = vrot.lane.b32.xlu0 %v348, 64
    %v579 = vpop.permute.xlu0 %578
    %581 = vrot.lane.b32.xlu0 %v356, 64
    %v582 = vpop.permute.xlu0 %581
    %v584 = vsel %vm366, %v579, 0
    %v587 = vsel %vm366, %v582, 0
    %589 = vmatprep.subr.bf16.mxu0 0
    %590 = vmatpush1.bf16.xpose.msra.mxu0 %v587
    %591 = vmatprep.subr.bf16.mxu0 0
    %592 = vmatpush1.bf16.xpose.msra.mxu0 0
    %593 = vmatprep.subr.bf16.mxu0 0
    %594 = vmatpush1.bf16.xpose.msra.mxu0 0
    %595 = vmatprep.subr.bf16.mxu0 0
    %596 = vmatpush1.bf16.xpose.msra.mxu0 0
    %597 = vmatprep.subr.bf16.mxu0 0
    %598 = vmatpush1.bf16.xpose.msra.mxu0 0
    %599 = vmatprep.subr.bf16.mxu0 0
    %600 = vmatpush1.bf16.xpose.msra.mxu0 0
    %601 = vmatprep.subr.bf16.mxu0 0
    %602 = vmatpush1.bf16.xpose.msra.mxu0 0
    %603 = vmatprep.subr.bf16.mxu0 0
    %604 = vmatpush1.bf16.xpose.msra.mxu0 0
    %605 = vmatprep.subr.bf16.mxu0 0
    %606 = vmatpush1.bf16.xpose.msra.mxu0 0
    %607 = vmatprep.subr.bf16.mxu0 0
    %608 = vmatpush1.bf16.xpose.msra.mxu0 0
    %609 = vmatprep.subr.bf16.mxu0 0
    %610 = vmatpush1.bf16.xpose.msra.mxu0 0
    %611 = vmatprep.subr.bf16.mxu0 0
    %612 = vmatpush1.bf16.xpose.msra.mxu0 0
    %613 = vmatprep.subr.bf16.mxu0 0
    %614 = vmatpush1.bf16.xpose.msra.mxu0 0
    %615 = vmatprep.subr.bf16.mxu0 0
    %616 = vmatpush1.bf16.xpose.msra.mxu0 0
    %617 = vmatprep.subr.bf16.mxu0 0
    %618 = vmatpush1.bf16.xpose.msra.mxu0 0
    %619 = vmatprep.subr.bf16.mxu0 0
    %620 = vmatpush1.bf16.xpose.msra.mxu0 0
    %621 = vmatprep.mubr.bf16.mxu0 0
    %622 = vmatmul.mubr.bf16.gmra.mrb[0].mxu0 %v584
    %v623 = vpop.f32.mrb[0].mxu0
    %v624 = vadd.f32 0.0, %v623
    %v625 = vpop.f32.mrb[0].mxu0
    %v626 = vpop.f32.mrb[0].mxu0
    %v627 = vpop.f32.mrb[0].mxu0
    %628 = vdwg.mxu0
    %630 = vrot.lane.b32.xlu0 %v349, 64
    %v631 = vpop.permute.xlu0 %630
    %633 = vrot.lane.b32.xlu0 %v357, 64
    %v634 = vpop.permute.xlu0 %633
    %v636 = vsel %vm366, %v631, 0
    %v639 = vsel %vm366, %v634, 0
    %641 = vmatprep.subr.bf16.mxu0 0
    %642 = vmatpush1.bf16.xpose.msra.mxu0 %v639
    %643 = vmatprep.subr.bf16.mxu0 0
    %644 = vmatpush1.bf16.xpose.msra.mxu0 0
    %645 = vmatprep.subr.bf16.mxu0 0
    %646 = vmatpush1.bf16.xpose.msra.mxu0 0
    %647 = vmatprep.subr.bf16.mxu0 0
    %648 = vmatpush1.bf16.xpose.msra.mxu0 0
    %649 = vmatprep.subr.bf16.mxu0 0
    %650 = vmatpush1.bf16.xpose.msra.mxu0 0
    %651 = vmatprep.subr.bf16.mxu0 0
    %652 = vmatpush1.bf16.xpose.msra.mxu0 0
    %653 = vmatprep.subr.bf16.mxu0 0
    %654 = vmatpush1.bf16.xpose.msra.mxu0 0
    %655 = vmatprep.subr.bf16.mxu0 0
    %656 = vmatpush1.bf16.xpose.msra.mxu0 0
    %657 = vmatprep.subr.bf16.mxu0 0
    %658 = vmatpush1.bf16.xpose.msra.mxu0 0
    %659 = vmatprep.subr.bf16.mxu0 0
    %660 = vmatpush1.bf16.xpose.msra.mxu0 0
    %661 = vmatprep.subr.bf16.mxu0 0
    %662 = vmatpush1.bf16.xpose.msra.mxu0 0
    %663 = vmatprep.subr.bf16.mxu0 0
    %664 = vmatpush1.bf16.xpose.msra.mxu0 0
    %665 = vmatprep.subr.bf16.mxu0 0
    %666 = vmatpush1.bf16.xpose.msra.mxu0 0
    %667 = vmatprep.subr.bf16.mxu0 0
    %668 = vmatpush1.bf16.xpose.msra.mxu0 0
    %669 = vmatprep.subr.bf16.mxu0 0
    %670 = vmatpush1.bf16.xpose.msra.mxu0 0
    %671 = vmatprep.subr.bf16.mxu0 0
    %672 = vmatpush1.bf16.xpose.msra.mxu0 0
    %673 = vmatprep.mubr.bf16.mxu0 0
    %674 = vmatmul.mubr.bf16.gmra.mrb[0].mxu0 %v636
    %v675 = vpop.f32.mrb[0].mxu0
    %v676 = vadd.f32 0.0, %v675
    %v677 = vpop.f32.mrb[0].mxu0
    %v678 = vpop.f32.mrb[0].mxu0
    %v679 = vpop.f32.mrb[0].mxu0
    %680 = vdwg.mxu0
    %v681 = vsel %vm459, %v624, -inf
    %682 = vmax.xlane.f32.xlu0 %v681
    %v683 = vpop.xlane.xlu0 %682
    %v684 = vsel %vm459, %v676, -inf
    %685 = vmax.xlane.f32.xlu0 %v684
    %v686 = vpop.xlane.xlu0 %685
    %v687 = vsub.f32 %v624, %v683
    %v688 = vsub.f32 %v676, %v686
    %v689 = vmul.f32 %v687, 1.442695
    %v690 = vpow.pop %v689
    %v691 = vmul.f32 %v688, 1.442695
    %v692 = vpow.pop %v691
    %v693 = vsel %vm459, %v690, 0.0
    %694 = vadd.xlane.f32.xlu0 %v693
    %v695 = vpop.xlane.xlu0 %694
    %v696 = vsel %vm459, %v692, 0.0
    %697 = vadd.xlane.f32.xlu0 %v696
    %v698 = vpop.xlane.xlu0 %697
    %v699 = vrcp.pop %v695
    %v700 = vrcp.pop %v698
    %v701 = vmul.f32 %v690, %v699
    %v702 = vmul.f32 %v692, %v700
    %v703 = vpack.c.bf16 %v701, %v701
    %v704 = vpack.c.bf16 %v702, %v702
    %706 = vrot.lane.b32.xlu0 %v364, 64
    %v707 = vpop.permute.xlu0 %706
    %v709 = vsel %vm459, %v703, 0
    %v712 = vsel %vm487, %v707, 0
    %714 = vmatprep.subr.bf16.mxu0 0
    %715 = vmatpush1.bf16.msra.mxu0 %v712
    %716 = vmatprep.subr.bf16.mxu0 0
    %717 = vmatpush1.bf16.msra.mxu0 0
    %718 = vmatprep.subr.bf16.mxu0 0
    %719 = vmatpush1.bf16.msra.mxu0 0
    %720 = vmatprep.subr.bf16.mxu0 0
    %721 = vmatpush1.bf16.msra.mxu0 0
    %722 = vmatprep.subr.bf16.mxu0 0
    %723 = vmatpush1.bf16.msra.mxu0 0
    %724 = vmatprep.subr.bf16.mxu0 0
    %725 = vmatpush1.bf16.msra.mxu0 0
    %726 = vmatprep.subr.bf16.mxu0 0
    %727 = vmatpush1.bf16.msra.mxu0 0
    %728 = vmatprep.subr.bf16.mxu0 0
    %729 = vmatpush1.bf16.msra.mxu0 0
    %730 = vmatprep.subr.bf16.mxu0 0
    %731 = vmatpush1.bf16.msra.mxu0 0
    %732 = vmatprep.subr.bf16.mxu0 0
    %733 = vmatpush1.bf16.msra.mxu0 0
    %734 = vmatprep.subr.bf16.mxu0 0
    %735 = vmatpush1.bf16.msra.mxu0 0
    %736 = vmatprep.subr.bf16.mxu0 0
    %737 = vmatpush1.bf16.msra.mxu0 0
    %738 = vmatprep.subr.bf16.mxu0 0
    %739 = vmatpush1.bf16.msra.mxu0 0
    %740 = vmatprep.subr.bf16.mxu0 0
    %741 = vmatpush1.bf16.msra.mxu0 0
    %742 = vmatprep.subr.bf16.mxu0 0
    %743 = vmatpush1.bf16.msra.mxu0 0
    %744 = vmatprep.subr.bf16.mxu0 0
    %745 = vmatpush1.bf16.msra.mxu0 0
    %746 = vmatprep.mubr.bf16.mxu0 0
    %747 = vmatmul.mubr.bf16.gmra.mrb[0].mxu0 %v709
    %v748 = vpop.f32.mrb[0].mxu0
    %v749 = vadd.f32 0.0, %v748
    %v750 = vpop.f32.mrb[0].mxu0
    %v751 = vpop.f32.mrb[0].mxu0
    %v752 = vpop.f32.mrb[0].mxu0
    %753 = vdwg.mxu0
    %755 = vrot.lane.b32.xlu0 %v365, 64
    %v756 = vpop.permute.xlu0 %755
    %v758 = vsel %vm459, %v704, 0
    %v761 = vsel %vm487, %v756, 0
    %763 = vmatprep.subr.bf16.mxu0 0
    %764 = vmatpush1.bf16.msra.mxu0 %v761
    %765 = vmatprep.subr.bf16.mxu0 0
    %766 = vmatpush1.bf16.msra.mxu0 0
    %767 = vmatprep.subr.bf16.mxu0 0
    %768 = vmatpush1.bf16.msra.mxu0 0
    %769 = vmatprep.subr.bf16.mxu0 0
    %770 = vmatpush1.bf16.msra.mxu0 0
    %771 = vmatprep.subr.bf16.mxu0 0
    %772 = vmatpush1.bf16.msra.mxu0 0
    %773 = vmatprep.subr.bf16.mxu0 0
    %774 = vmatpush1.bf16.msra.mxu0 0
    %775 = vmatprep.subr.bf16.mxu0 0
    %776 = vmatpush1.bf16.msra.mxu0 0
    %777 = vmatprep.subr.bf16.mxu0 0
    %778 = vmatpush1.bf16.msra.mxu0 0
    %779 = vmatprep.subr.bf16.mxu0 0
    %780 = vmatpush1.bf16.msra.mxu0 0
    %781 = vmatprep.subr.bf16.mxu0 0
    %782 = vmatpush1.bf16.msra.mxu0 0
    %783 = vmatprep.subr.bf16.mxu0 0
    %784 = vmatpush1.bf16.msra.mxu0 0
    %785 = vmatprep.subr.bf16.mxu0 0
    %786 = vmatpush1.bf16.msra.mxu0 0
    %787 = vmatprep.subr.bf16.mxu0 0
    %788 = vmatpush1.bf16.msra.mxu0 0
    %789 = vmatprep.subr.bf16.mxu0 0
    %790 = vmatpush1.bf16.msra.mxu0 0
    %791 = vmatprep.subr.bf16.mxu0 0
    %792 = vmatpush1.bf16.msra.mxu0 0
    %793 = vmatprep.subr.bf16.mxu0 0
    %794 = vmatpush1.bf16.msra.mxu0 0
    %795 = vmatprep.mubr.bf16.mxu0 0
    %796 = vmatmul.mubr.bf16.gmra.mrb[0].mxu0 %v758
    %v797 = vpop.f32.mrb[0].mxu0
    %v798 = vadd.f32 0.0, %v797
    %v799 = vpop.f32.mrb[0].mxu0
    %v800 = vpop.f32.mrb[0].mxu0
    %v801 = vpop.f32.mrb[0].mxu0
    %802 = vdwg.mxu0
    %805 = vrot.lane.b32.xlu0 %v749, 64
    %v806 = vpop.permute.xlu0 %805
    %807 = vrot.lane.b32.xlu0 %v798, 64
    %v808 = vpop.permute.xlu0 %807
    %v811 = vsel %vm366, %v526, %v806
    %v812 = vsel %vm366, %v572, %v808
    %v813 = vpack.c.bf16 %v812, %v811
    %v814 = vld [vmem:[#allocation7] sm:$0xf]
    %v815 = vld [vmem:[#allocation7 + $0x4] sm:$0xf]
    %v816 = vld [vmem:[#allocation7 + $0x8] sm:$0xf]
    %v817 = vld [vmem:[#allocation7 + $0xc] sm:$0xf]
    %v818 = vld [vmem:[#allocation7 + $0x10] sm:$0xf]
    %v819 = vld [vmem:[#allocation7 + $0x14] sm:$0xf]
    %v820 = vld [vmem:[#allocation7 + $0x18] sm:$0xf]
    %v821 = vld [vmem:[#allocation7 + $0x1c] sm:$0xf]
    %v822 = vld [vmem:[#allocation7 + $0x20] sm:$0xf]
    %v823 = vld [vmem:[#allocation7 + $0x24] sm:$0xf]
    %v824 = vld [vmem:[#allocation7 + $0x28] sm:$0xf]
    %v825 = vld [vmem:[#allocation7 + $0x2c] sm:$0xf]
    %v826 = vld [vmem:[#allocation7 + $0x30] sm:$0xf]
    %v827 = vld [vmem:[#allocation7 + $0x34] sm:$0xf]
    %v828 = vld [vmem:[#allocation7 + $0x38] sm:$0xf]
    %v829 = vld [vmem:[#allocation7 + $0x3c] sm:$0xf]
    %v830 = vlaneseq
    %v831 = vshrl.u32 %v830, 7
    %v832 = vsub.s32 3, %v831
    %v833 = vrot.slane %v340, %v832
    %v850 = vunpack.c.l.b16 %v814
    %v851 = vunpack.c.l.b16 %v815
    %v852 = vunpack.c.l.b16 %v816
    %v853 = vunpack.c.l.b16 %v817
    %v854 = vunpack.c.l.b16 %v818
    %v855 = vunpack.c.l.b16 %v819
    %v856 = vunpack.c.l.b16 %v820
    %v857 = vunpack.c.l.b16 %v821
    %v858 = vunpack.c.l.b16 %v822
    %v859 = vunpack.c.l.b16 %v823
    %v860 = vunpack.c.l.b16 %v824
    %v861 = vunpack.c.l.b16 %v825
    %v862 = vunpack.c.l.b16 %v826
    %v863 = vunpack.c.l.b16 %v827
    %v864 = vunpack.c.l.b16 %v828
    %v865 = vunpack.c.l.b16 %v829
    %v866 = vpack.c.b16 %v851, %v850
    %v867 = vpack.c.b16 %v853, %v852
    %v868 = vpack.c.b16 %v855, %v854
    %v869 = vpack.c.b16 %v857, %v856
    %v870 = vpack.c.b16 %v859, %v858
    %v871 = vpack.c.b16 %v861, %v860
    %v872 = vpack.c.b16 %v863, %v862
    %v873 = vpack.c.b16 %v865, %v864
    %882 = vmatprep.subr.bf16.mxu0 0
    %883 = vmatpush1.bf16.msra.mxu0 %v866
    %884 = vmatprep.subr.bf16.mxu0 0
    %885 = vmatpush1.bf16.msra.mxu0 %v867
    %886 = vmatprep.subr.bf16.mxu0 0
    %887 = vmatpush1.bf16.msra.mxu0 %v868
    %888 = vmatprep.subr.bf16.mxu0 0
    %889 = vmatpush1.bf16.msra.mxu0 %v869
    %890 = vmatprep.subr.bf16.mxu0 0
    %891 = vmatpush1.bf16.msra.mxu0 %v870
    %892 = vmatprep.subr.bf16.mxu0 0
    %893 = vmatpush1.bf16.msra.mxu0 %v871
    %894 = vmatprep.subr.bf16.mxu0 0
    %895 = vmatpush1.bf16.msra.mxu0 %v872
    %896 = vmatprep.subr.bf16.mxu0 0
    %897 = vmatpush1.bf16.msra.mxu0 %v873
    %898 = vmatprep.subr.bf16.mxu0 0
    %899 = vmatpush1.bf16.msra.mxu0 0
    %900 = vmatprep.subr.bf16.mxu0 0
    %901 = vmatpush1.bf16.msra.mxu0 0
    %902 = vmatprep.subr.bf16.mxu0 0
    %903 = vmatpush1.bf16.msra.mxu0 0
    %904 = vmatprep.subr.bf16.mxu0 0
    %905 = vmatpush1.bf16.msra.mxu0 0
    %906 = vmatprep.subr.bf16.mxu0 0
    %907 = vmatpush1.bf16.msra.mxu0 0
    %908 = vmatprep.subr.bf16.mxu0 0
    %909 = vmatpush1.bf16.msra.mxu0 0
    %910 = vmatprep.subr.bf16.mxu0 0
    %911 = vmatpush1.bf16.msra.mxu0 0
    %912 = vmatprep.subr.bf16.mxu0 0
    %913 = vmatpush1.bf16.msra.mxu0 0
    %914 = vmatprep.mubr.bf16.mxu0 0
    %915 = vmatmul.mubr.bf16.gmra.mrb[0].mxu0 %v813
    %v916 = vpop.f32.mrb[0].mxu0
    %v917 = vadd.f32 %v833, %v916
    %v918 = vpop.f32.mrb[0].mxu0
    %v919 = vpop.f32.mrb[0].mxu0
    %v920 = vadd.f32 %v833, %v919
    %v921 = vpop.f32.mrb[0].mxu0
    %922 = vdwg.mxu0
    %v923 = vadd.f32 %v93, %v917
    %v924 = vadd.f32 %v94, %v920
    %925 = vadd.xlane.f32.xlu0 %v923
    %v926 = vpop.xlane.xlu0 %925
    %927 = vadd.xlane.f32.xlu0 %v924
    %v928 = vpop.xlane.xlu0 %927
    %v929 = vrcp.pop 128.0
    %v930 = vmul.f32 %v926, %v929
    %v931 = vmul.f32 %v928, %v929
    %v932 = vsub.f32 %v923, %v930
    %v933 = vsub.f32 %v924, %v931
    %v934 = vmul.f32 %v932, %v932
    %v935 = vmul.f32 %v933, %v933
    %936 = vadd.xlane.f32.xlu0 %v934
    %v937 = vpop.xlane.xlu0 %936
    %938 = vadd.xlane.f32.xlu0 %v935
    %v939 = vpop.xlane.xlu0 %938
    %v940 = vmul.f32 %v937, %v929
    %v941 = vmul.f32 %v939, %v929
    %v942 = vadd.f32 %v940, 1e-05
    %v943 = vadd.f32 %v941, 1e-05
    %v944 = vrsqrt.pop %v942
    %v945 = vrsqrt.pop %v943
    %v946 = vmul.f32 %v932, %v944
    %v947 = vmul.f32 %v933, %v945
    %v948 = vlaneseq
    %v949 = vshrl.u32 %v948, 7
    %v950 = vsub.s32 4, %v949
    %v951 = vrot.slane %v340, %v950
    %v952 = vmul.f32 %v946, %v951
    %v953 = vmul.f32 %v947, %v951
    %v954 = vlaneseq
    %v955 = vshrl.u32 %v954, 7
    %v956 = vsub.s32 5, %v955
    %v957 = vrot.slane %v340, %v956
    %v958 = vadd.f32 %v952, %v957
    %v959 = vadd.f32 %v953, %v957
    %v960 = vpack.c.bf16 %v959, %v958
    %v961 = vld [vmem:[#allocation8] sm:$0xf]
    %v962 = vld [vmem:[#allocation8 + $0x4] sm:$0xf]
    %v963 = vld [vmem:[#allocation8 + $0x8] sm:$0xf]
    %v964 = vld [vmem:[#allocation8 + $0xc] sm:$0xf]
    %v965 = vld [vmem:[#allocation8 + $0x10] sm:$0xf]
    %v966 = vld [vmem:[#allocation8 + $0x14] sm:$0xf]
    %v967 = vld [vmem:[#allocation8 + $0x18] sm:$0xf]
    %v968 = vld [vmem:[#allocation8 + $0x1c] sm:$0xf]
    %v969 = vld [vmem:[#allocation8 + $0x20] sm:$0xf]
    %v970 = vld [vmem:[#allocation8 + $0x24] sm:$0xf]
    %v971 = vld [vmem:[#allocation8 + $0x28] sm:$0xf]
    %v972 = vld [vmem:[#allocation8 + $0x2c] sm:$0xf]
    %v973 = vld [vmem:[#allocation8 + $0x30] sm:$0xf]
    %v974 = vld [vmem:[#allocation8 + $0x34] sm:$0xf]
    %v975 = vld [vmem:[#allocation8 + $0x38] sm:$0xf]
    %v976 = vld [vmem:[#allocation8 + $0x3c] sm:$0xf]
    %v977 = vlaneseq
    %v978 = vshrl.u32 %v977, 7
    %v979 = vsub.s32 1, %v978
    %v980 = vrot.slane %v341, %v979
    %v997 = vunpack.c.l.b16 %v961
    %v998 = vunpack.c.l.b16 %v962
    %v999 = vunpack.c.l.b16 %v963
    %v1000 = vunpack.c.l.b16 %v964
    %v1001 = vunpack.c.l.b16 %v965
    %v1002 = vunpack.c.l.b16 %v966
    %v1003 = vunpack.c.l.b16 %v967
    %v1004 = vunpack.c.l.b16 %v968
    %v1005 = vunpack.c.l.b16 %v969
    %v1006 = vunpack.c.l.b16 %v970
    %v1007 = vunpack.c.l.b16 %v971
    %v1008 = vunpack.c.l.b16 %v972
    %v1009 = vunpack.c.l.b16 %v973
    %v1010 = vunpack.c.l.b16 %v974
    %v1011 = vunpack.c.l.b16 %v975
    %v1012 = vunpack.c.l.b16 %v976
    %v1013 = vpack.c.b16 %v998, %v997
    %v1014 = vpack.c.b16 %v1000, %v999
    %v1015 = vpack.c.b16 %v1002, %v1001
    %v1016 = vpack.c.b16 %v1004, %v1003
    %v1017 = vpack.c.b16 %v1006, %v1005
    %v1018 = vpack.c.b16 %v1008, %v1007
    %v1019 = vpack.c.b16 %v1010, %v1009
    %v1020 = vpack.c.b16 %v1012, %v1011
    %1029 = vmatprep.subr.bf16.mxu0 0
    %1030 = vmatpush1.bf16.msra.mxu0 %v1013
    %1031 = vmatprep.subr.bf16.mxu0 0
    %1032 = vmatpush1.bf16.msra.mxu0 %v1014
    %1033 = vmatprep.subr.bf16.mxu0 0
    %1034 = vmatpush1.bf16.msra.mxu0 %v1015
    %1035 = vmatprep.subr.bf16.mxu0 0
    %1036 = vmatpush1.bf16.msra.mxu0 %v1016
    %1037 = vmatprep.subr.bf16.mxu0 0
    %1038 = vmatpush1.bf16.msra.mxu0 %v1017
    %1039 = vmatprep.subr.bf16.mxu0 0
    %1040 = vmatpush1.bf16.msra.mxu0 %v1018
    %1041 = vmatprep.subr.bf16.mxu0 0
    %1042 = vmatpush1.bf16.msra.mxu0 %v1019
    %1043 = vmatprep.subr.bf16.mxu0 0
    %1044 = vmatpush1.bf16.msra.mxu0 %v1020
    %1045 = vmatprep.subr.bf16.mxu0 0
    %1046 = vmatpush1.bf16.msra.mxu0 0
    %1047 = vmatprep.subr.bf16.mxu0 0
    %1048 = vmatpush1.bf16.msra.mxu0 0
    %1049 = vmatprep.subr.bf16.mxu0 0
    %1050 = vmatpush1.bf16.msra.mxu0 0
    %1051 = vmatprep.subr.bf16.mxu0 0
    %1052 = vmatpush1.bf16.msra.mxu0 0
    %1053 = vmatprep.subr.bf16.mxu0 0
    %1054 = vmatpush1.bf16.msra.mxu0 0
    %1055 = vmatprep.subr.bf16.mxu0 0
    %1056 = vmatpush1.bf16.msra.mxu0 0
    %1057 = vmatprep.subr.bf16.mxu0 0
    %1058 = vmatpush1.bf16.msra.mxu0 0
    %1059 = vmatprep.subr.bf16.mxu0 0
    %1060 = vmatpush1.bf16.msra.mxu0 0
    %1061 = vmatprep.mubr.bf16.mxu0 0
    %1062 = vmatmul.mubr.bf16.gmra.mrb[0].mxu0 %v960
    %v1063 = vpop.f32.mrb[0].mxu0
    %v1064 = vadd.f32 %v980, %v1063
    %v1065 = vpop.f32.mrb[0].mxu0
    %v1066 = vpop.f32.mrb[0].mxu0
    %v1067 = vadd.f32 %v980, %v1066
    %v1068 = vpop.f32.mrb[0].mxu0
    %1069 = vdwg.mxu0
    %v1070 = vmax.f32 %v1064, 0.0
    %v1071 = vmax.f32 %v1067, 0.0
    %v1072 = vpack.c.bf16 %v1071, %v1070
    %v1073 = vld [vmem:[#allocation10] sm:$0xf]
    %v1074 = vld [vmem:[#allocation10 + $0x4] sm:$0xf]
    %v1075 = vld [vmem:[#allocation10 + $0x8] sm:$0xf]
    %v1076 = vld [vmem:[#allocation10 + $0xc] sm:$0xf]
    %v1077 = vld [vmem:[#allocation10 + $0x10] sm:$0xf]
    %v1078 = vld [vmem:[#allocation10 + $0x14] sm:$0xf]
    %v1079 = vld [vmem:[#allocation10 + $0x18] sm:$0xf]
    %v1080 = vld [vmem:[#allocation10 + $0x1c] sm:$0xf]
    %v1081 = vld [vmem:[#allocation10 + $0x20] sm:$0xf]
    %v1082 = vld [vmem:[#allocation10 + $0x24] sm:$0xf]
    %v1083 = vld [vmem:[#allocation10 + $0x28] sm:$0xf]
    %v1084 = vld [vmem:[#allocation10 + $0x2c] sm:$0xf]
    %v1085 = vld [vmem:[#allocation10 + $0x30] sm:$0xf]
    %v1086 = vld [vmem:[#allocation10 + $0x34] sm:$0xf]
    %v1087 = vld [vmem:[#allocation10 + $0x38] sm:$0xf]
    %v1088 = vld [vmem:[#allocation10 + $0x3c] sm:$0xf]
    %v1089 = vlaneseq
    %v1090 = vshrl.u32 %v1089, 7
    %v1091 = vsub.s32 6, %v1090
    %v1092 = vrot.slane %v340, %v1091
    %v1109 = vunpack.c.l.b16 %v1073
    %v1110 = vunpack.c.l.b16 %v1074
    %v1111 = vunpack.c.l.b16 %v1075
    %v1112 = vunpack.c.l.b16 %v1076
    %v1113 = vunpack.c.l.b16 %v1077
    %v1114 = vunpack.c.l.b16 %v1078
    %v1115 = vunpack.c.l.b16 %v1079
    %v1116 = vunpack.c.l.b16 %v1080
    %v1117 = vunpack.c.l.b16 %v1081
    %v1118 = vunpack.c.l.b16 %v1082
    %v1119 = vunpack.c.l.b16 %v1083
    %v1120 = vunpack.c.l.b16 %v1084
    %v1121 = vunpack.c.l.b16 %v1085
    %v1122 = vunpack.c.l.b16 %v1086
    %v1123 = vunpack.c.l.b16 %v1087
    %v1124 = vunpack.c.l.b16 %v1088
    %v1125 = vpack.c.b16 %v1110, %v1109
    %v1126 = vpack.c.b16 %v1112, %v1111
    %v1127 = vpack.c.b16 %v1114, %v1113
    %v1128 = vpack.c.b16 %v1116, %v1115
    %v1129 = vpack.c.b16 %v1118, %v1117
    %v1130 = vpack.c.b16 %v1120, %v1119
    %v1131 = vpack.c.b16 %v1122, %v1121
    %v1132 = vpack.c.b16 %v1124, %v1123
    %1141 = vmatprep.subr.bf16.mxu0 0
    %1142 = vmatpush1.bf16.msra.mxu0 %v1125
    %1143 = vmatprep.subr.bf16.mxu0 0
    %1144 = vmatpush1.bf16.msra.mxu0 %v1126
    %1145 = vmatprep.subr.bf16.mxu0 0
    %1146 = vmatpush1.bf16.msra.mxu0 %v1127
    %1147 = vmatprep.subr.bf16.mxu0 0
    %1148 = vmatpush1.bf16.msra.mxu0 %v1128
    %1149 = vmatprep.subr.bf16.mxu0 0
    %1150 = vmatpush1.bf16.msra.mxu0 %v1129
    %1151 = vmatprep.subr.bf16.mxu0 0
    %1152 = vmatpush1.bf16.msra.mxu0 %v1130
    %1153 = vmatprep.subr.bf16.mxu0 0
    %1154 = vmatpush1.bf16.msra.mxu0 %v1131
    %1155 = vmatprep.subr.bf16.mxu0 0
    %1156 = vmatpush1.bf16.msra.mxu0 %v1132
    %1157 = vmatprep.subr.bf16.mxu0 0
    %1158 = vmatpush1.bf16.msra.mxu0 0
    %1159 = vmatprep.subr.bf16.mxu0 0
    %1160 = vmatpush1.bf16.msra.mxu0 0
    %1161 = vmatprep.subr.bf16.mxu0 0
    %1162 = vmatpush1.bf16.msra.mxu0 0
    %1163 = vmatprep.subr.bf16.mxu0 0
    %1164 = vmatpush1.bf16.msra.mxu0 0
    %1165 = vmatprep.subr.bf16.mxu0 0
    %1166 = vmatpush1.bf16.msra.mxu0 0
    %1167 = vmatprep.subr.bf16.mxu0 0
    %1168 = vmatpush1.bf16.msra.mxu0 0
    %1169 = vmatprep.subr.bf16.mxu0 0
    %1170 = vmatpush1.bf16.msra.mxu0 0
    %1171 = vmatprep.subr.bf16.mxu0 0
    %1172 = vmatpush1.bf16.msra.mxu0 0
    %1173 = vmatprep.mubr.bf16.mxu0 0
    %1174 = vmatmul.mubr.bf16.gmra.mrb[0].mxu0 %v1072
    %v1175 = vpop.f32.mrb[0].mxu0
    %v1176 = vadd.f32 %v1092, %v1175
    %v1177 = vpop.f32.mrb[0].mxu0
    %v1178 = vpop.f32.mrb[0].mxu0
    %v1179 = vadd.f32 %v1092, %v1178
    %v1180 = vpop.f32.mrb[0].mxu0
    %1181 = vdwg.mxu0
    %v1182 = vadd.f32 %v958, %v1176
    %v1183 = vadd.f32 %v959, %v1179
    %1184 = vadd.xlane.f32.xlu0 %v1182
    %v1185 = vpop.xlane.xlu0 %1184
    %1186 = vadd.xlane.f32.xlu0 %v1183
    %v1187 = vpop.xlane.xlu0 %1186
    %v1188 = vmul.f32 %v1185, %v929
    %v1189 = vmul.f32 %v1187, %v929
    %v1190 = vsub.f32 %v1182, %v1188
    %v1191 = vsub.f32 %v1183, %v1189
    %v1192 = vmul.f32 %v1190, %v1190
    %v1193 = vmul.f32 %v1191, %v1191
    %1194 = vadd.xlane.f32.xlu0 %v1192
    %v1195 = vpop.xlane.xlu0 %1194
    %1196 = vadd.xlane.f32.xlu0 %v1193
    %v1197 = vpop.xlane.xlu0 %1196
    %v1198 = vmul.f32 %v1195, %v929
    %v1199 = vmul.f32 %v1197, %v929
    %v1200 = vadd.f32 %v1198, 1e-05
    %v1201 = vadd.f32 %v1199, 1e-05
    %v1202 = vrsqrt.pop %v1200
    %v1203 = vrsqrt.pop %v1201
    %v1204 = vmul.f32 %v1190, %v1202
    %v1205 = vmul.f32 %v1191, %v1203
    %v1206 = vlaneseq
    %v1207 = vshrl.u32 %v1206, 7
    %v1208 = vsub.s32 7, %v1207
    %v1209 = vrot.slane %v340, %v1208
    %v1210 = vmul.f32 %v1204, %v1209
    %v1211 = vmul.f32 %v1205, %v1209
    %v1212 = vlaneseq
    %v1213 = vshrl.u32 %v1212, 7
    %v1214 = vsub.s32 0, %v1213
    %v1215 = vrot.slane %v341, %v1214
    %v1216 = vadd.f32 %v1210, %v1215
    %v1217 = vadd.f32 %v1211, %v1215
    %1218 = vst [vmem:[#allocation11] sm:$0xff] %v1216
    %1219 = vst [vmem:[#allocation11 + $0x8] sm:$0xff] %v1217
    // Predicated region
    $region46: #{tpu_custom_call.1} parent=1 // pred_check
      _
    $region47: #{tpu_custom_call.1} parent=1 // pred_check_branch
      %1221 = sbr.rel (0) target = $region49
    $region48: #{tpu_custom_call.1} parent=1 // pred_region
      %s1223 = ssub.s32 256, 256
      %1224 = vsyncadd [#allocation4], %s1223
      %s1225 = sshll.u32 [#allocation11], 4
      %s1226 = int_to_ptr.vmem [resolvable:$true] %s1225
      %1231 = dma.vmem_to_hbm [thread:$0]  %s1226, 256, %s6, [#allocation4], 128, 128, 8
    $region49: #{tpu_custom_call.1} parent=1 // pred_fallthru
      _
    // Predicated region
    $region50: #{tpu_custom_call.1} parent=1 // pred_check
      _
    $region51: #{tpu_custom_call.1} parent=1 // pred_check_branch
      %1233 = sbr.rel (0) target = $region53
    $region52: #{tpu_custom_call.1} parent=1 // pred_region
      %1234 = dma.done [#allocation4], 256
    $region53: #{tpu_custom_call.1} parent=1 // pred_fallthru
      _
    %1235 = vsyncpa [#allocation3], 1
    %1236 = vsyncpa [#allocation6], 1
    %1237 = vsyncpa [#allocation9], 1
    %1238 = vsyncpa [#allocation4], 1

</llo_original>
